<compile_context>
chip_gen: v7x
topology: tpu7x:2x2x1
jax: 0.10.0
libtpu: 0.0.40
codegen_flags: <defaults>
</compile_context>

<pallas_src>
import functools

import jax
import jax.numpy as jnp
from jax import lax
from jax.experimental import pallas as pl
from jax.experimental.pallas import tpu as pltpu


def _dot_exact_rhs01(lhs_f32, rhs_f32):
    """(TM, K) @ (K, N) with ~f32 accuracy from two DEFAULT (1-pass bf16) matmuls.

    The RHS is a 0/1 selection matrix (exactly representable in bf16), so only
    the LHS needs a bf16 hi/lo split; two MXU passes recover ~17 mantissa bits
    (rel. err ~1e-5), vs ~6 passes for precision=HIGHEST.
    """
    hi = lhs_f32.astype(jnp.bfloat16).astype(jnp.float32)
    lo = lhs_f32 - hi                       # exact residual (Sterbenz)
    return (jnp.dot(hi, rhs_f32, preferred_element_type=jnp.float32)
            + jnp.dot(lo, rhs_f32, preferred_element_type=jnp.float32))


def _volume_sdf_kernel(tri_ref, expand_ref, cmask_ref, depth_ref, dist_ref,
                       color_ref, out_ref, *, alpha, beta):
    # tri_ref    : (P, P)    tri[j, i] = 1 if j < i       (exclusive cumsum)
    # expand_ref : (P, 3P)   expand[p, 3p + c] = 1        (weight lane expansion)
    # cmask_ref  : (3, 3P)   cmask[c, q] = 1 if q % 3 == c
    # depth_ref  : (TM, P)   sample depths along each ray
    # dist_ref   : (TM, P)   signed distance at each sample
    # color_ref  : (TM, 3P)  per-sample color, interleaved [p0c0 p0c1 p0c2 p1c0 ...]
    # out_ref    : (TM, 3)   volume-rendered color per ray
    depth = depth_ref[...]
    dist = dist_ref[...]
    tm, P = depth.shape

    # deltas[i] = depth[i+1] - depth[i]; last delta = 1e10 (matches torch.cat trick).
    # Next sample via an XLU lane rotation (shift=P-1 == -1 mod P); the wrapped
    # lane is overwritten by the 1e10 last delta.
    depth_next = pltpu.roll(depth, shift=P - 1, axis=1)
    col = lax.broadcasted_iota(jnp.int32, (tm, P), 1)
    deltas = jnp.where(col == P - 1, jnp.float32(1e10), depth_next - depth)

    # sdf_to_density: alpha * psi(-distance), Laplace CDF with ONE exp (EUP).
    s = -dist
    e = jnp.exp(-jnp.abs(s) * (1.0 / beta))
    density = alpha * jnp.where(s <= 0.0, 0.5 * e, 1.0 - 0.5 * e)

    # T_i = exp(-sum_{j<i} density_j*delta_j); w_i = T_i * (1 - exp(-density_i*delta_i))
    prods = -density * deltas                                # (TM, P)
    excl = _dot_exact_rhs01(prods, tri_ref[...])             # exclusive cumsum (MXU)
    w = jnp.exp(excl) * (1.0 - jnp.exp(prods))               # (TM, P)

    # Expand weights onto color's interleaved (point, channel) lane layout:
    # w3[n, 3p + c] = w[n, p]; aggregate each channel with a masked lane sum (XLU).
    w3 = _dot_exact_rhs01(w, expand_ref[...])                # (TM, 3P)
    wcs = w3 * color_ref[...]                                # (TM, 3P)
    cmask = cmask_ref[...]                                   # (3, 3P)
    sums = [jnp.sum(wcs * cmask[c:c + 1, :], axis=-1, keepdims=True)
            for c in range(3)]
    out_ref[...] = jnp.concatenate(sums, axis=-1)            # (TM, 3)


def _pick_tm(B, tm_max=2048):
    """Ray-tile rows: multiple of 128, <= tm_max, and >= 2 (preferably even)
    grid steps so v7x's two TensorCores both get tiles."""
    if B <= 128:
        return B                       # single block spanning the full extent
    b128 = pl.cdiv(B, 128) * 128
    n = max(2, pl.cdiv(b128, tm_max))
    if n % 2:
        n += 1
    tm = pl.cdiv(b128, n * 128) * 128
    return int(max(128, min(tm, tm_max)))


def render_batch(depth, dist, color, alpha, beta, tm_max=2048):
    """depth, dist: (B, P) f32 ; color: (B, P, 3) f32 -> (B, 3) f32."""
    B, P = depth.shape
    # (B, P, 3) -> (B, 3P) is a free, contiguous reshape (row-major interleave);
    # the kernel handles the interleaving, so color never round-trips HBM.
    color_slab = color.reshape(B, 3 * P)

    tm = _pick_tm(B, tm_max)
    n_blocks = pl.cdiv(B, tm)   # ragged last block: garbage rows are per-ray only
                                # and their output rows are masked on writeback.

    # Constant 0/1 operands, DMA'd once (constant index_map) and reused per step.
    p_row = jnp.arange(P, dtype=jnp.int32)[:, None]
    p_col = jnp.arange(P, dtype=jnp.int32)[None, :]
    tri = (p_row < p_col).astype(jnp.float32)                            # (P, P)
    q = jnp.arange(3 * P, dtype=jnp.int32)[None, :]
    expand = (q // 3 == p_row).astype(jnp.float32)                       # (P, 3P)
    cmask = (q % 3 == jnp.arange(3, dtype=jnp.int32)[:, None]).astype(jnp.float32)  # (3, 3P)

    kernel = functools.partial(_volume_sdf_kernel,
                               alpha=float(alpha), beta=float(beta))
    return pl.pallas_call(
        kernel,
        out_shape=jax.ShapeDtypeStruct((B, 3), jnp.float32),
        grid_spec=pltpu.PrefetchScalarGridSpec(
            num_scalar_prefetch=0,
            grid=(n_blocks,),
            in_specs=[
                pl.BlockSpec((P, P), lambda i: (0, 0)),
                pl.BlockSpec((P, 3 * P), lambda i: (0, 0)),
                pl.BlockSpec((3, 3 * P), lambda i: (0, 0)),
                pl.BlockSpec((tm, P), lambda i: (i, 0)),
                pl.BlockSpec((tm, P), lambda i: (i, 0)),
                pl.BlockSpec((tm, 3 * P), lambda i: (i, 0)),
            ],
            out_specs=pl.BlockSpec((tm, 3), lambda i: (i, 0)),
        ),
        compiler_params=pltpu.CompilerParams(
            dimension_semantics=("parallel",),
            vmem_limit_bytes=48 * 1024 * 1024),
    )(tri, expand, cmask, depth, dist, color_slab)


class VolumeSDFRendererPallas:
    """Mirrors VolumeSDFRenderer.forward.

    # TODO(synk): `sampler` and `implicit_fn.get_distance_color` are external
    # torch modules with no Pallas equivalent; their outputs (sample_lengths,
    # distance, color) are taken directly as inputs.  The original host chunk
    # loop only existed to bound those modules' memory use, so the fused
    # kernel tiles the batch itself instead.
    # TODO(synk): if the upstream producer can emit color channels-first
    # (3, B, P), the in-kernel weight-expansion matmul can be dropped too.
    """

    def __init__(self, cfg):
        self.chunk_size = cfg["chunk_size"]      # kept for API parity (unused)
        self.alpha = float(cfg["alpha"])
        self.beta = float(cfg["beta"])
        self.white_background = cfg.get("white_background", False)

    def __call__(self, sample_lengths, distance, color, need_geometry=False):
        # sample_lengths: (B, P, 1), distance: (B, P, 1), color: (B, P, 3)
        depth = sample_lengths[..., 0].astype(jnp.float32)     # (B, P)
        dist = distance[..., 0].astype(jnp.float32)            # (B, P)
        color = color.astype(jnp.float32)                      # (B, P, 3)
        out_color = render_batch(depth, dist, color, self.alpha, self.beta)
        # Original module returns zeros_like(pre-aggregation color); only
        # materialize that HBM write if the caller actually wants it.
        geometry = jnp.zeros_like(color) if need_geometry else None
        return {"color": out_color, "geometry": geometry}


def _reference(depth, dist, color, alpha, beta):
    """Pure-JAX transcription of the PyTorch code (for validation)."""
    deltas = jnp.concatenate(
        [depth[:, 1:] - depth[:, :-1], 1e10 * jnp.ones_like(depth[:, :1])], axis=-1)
    s = -dist
    psi = jnp.where(s <= 0, 0.5 * jnp.exp(s / beta), 1.0 - 0.5 * jnp.exp(-s / beta))
    density = alpha * psi
    prods = -density * deltas
    exp_prods = jnp.exp(prods)
    T = jnp.cumprod(
        jnp.concatenate([jnp.ones_like(exp_prods[:, :1]), exp_prods], axis=1)[:, :-1],
        axis=1)
    w = T * (1.0 - exp_prods)
    return jnp.sum(w[:, :, None] * color, axis=1)


if __name__ == "__main__":
    key = jax.random.PRNGKey(0)
    B, P = 200, 128            # 200 rays exercises the ragged-last-tile path
    cfg = {"chunk_size": 64, "alpha": 10.0, "beta": 0.5, "white_background": False}

    k1, k2, k3 = jax.random.split(key, 3)
    # monotonically increasing sample depths along each ray
    incs = jax.random.uniform(k1, (B, P), minval=0.01, maxval=0.1, dtype=jnp.float32)
    depth = jnp.cumsum(incs, axis=1) + 1.0
    sample_lengths = depth[..., None]                                  # (B, P, 1)
    distance = 0.5 * jax.random.normal(k2, (B, P, 1), dtype=jnp.float32)
    color = jax.random.uniform(k3, (B, P, 3), dtype=jnp.float32)

    renderer = VolumeSDFRendererPallas(cfg)
    out = renderer(sample_lengths, distance, color, need_geometry=True)
    jax.block_until_ready(out)

    ref_color = _reference(depth, distance[..., 0], color, cfg["alpha"], cfg["beta"])
    assert out["color"].shape == (B, 3)
    assert out["geometry"].shape == (B, P, 3)
    assert bool(jnp.all(out["geometry"] == 0.0))
    assert jnp.allclose(out["color"], ref_color, rtol=2e-3, atol=1e-5), (
        float(jnp.max(jnp.abs(out["color"] - ref_color))))
    print("KERNEL_OK")
</pallas_src>

<mosaic_0001>
module attributes {stable_mosaic.version = 11 : i64} {
  func.func @_volume_sdf_kernel(%arg0: i32, %arg1: memref<128x128xf32, #tpu.memory_space<vmem>>, %arg2: memref<128x384xf32, #tpu.memory_space<vmem>>, %arg3: memref<3x384xf32, #tpu.memory_space<vmem>>, %arg4: memref<128x128xf32, #tpu.memory_space<vmem>>, %arg5: memref<128x128xf32, #tpu.memory_space<vmem>>, %arg6: memref<128x384xf32, #tpu.memory_space<vmem>>, %arg7: memref<128x3xf32, #tpu.memory_space<vmem>>) attributes {dimension_semantics = [#tpu.dimension_semantics<parallel>], iteration_bounds = array<i64: 2>, scalar_prefetch = 0 : i64, scratch_operands = 0 : i64, tpu.core_type = #tpu.core_type<tc>, window_params = [{pipeline_mode = #tpu.pipeline_mode<synchronous>, transform_indices = @transform_0, window_bounds = array<i64: 128, 128>}, {pipeline_mode = #tpu.pipeline_mode<synchronous>, transform_indices = @transform_1, window_bounds = array<i64: 128, 384>}, {pipeline_mode = #tpu.pipeline_mode<synchronous>, transform_indices = @transform_2, window_bounds = array<i64: 3, 384>}, {transform_indices = @transform_3, window_bounds = array<i64: 128, 128>}, {transform_indices = @transform_4, window_bounds = array<i64: 128, 128>}, {transform_indices = @transform_5, window_bounds = array<i64: 128, 384>}, {transform_indices = @transform_6, window_bounds = array<i64: 128, 3>}]} {
    %c0 = arith.constant 0 : index
    %c0_0 = arith.constant 0 : index
    %0 = vector.load %arg4[%c0, %c0_0] : memref<128x128xf32, #tpu.memory_space<vmem>>, vector<128x128xf32>
    %c0_1 = arith.constant 0 : index
    %c0_2 = arith.constant 0 : index
    %1 = vector.load %arg5[%c0_1, %c0_2] : memref<128x128xf32, #tpu.memory_space<vmem>>, vector<128x128xf32>
    %c127_i32 = arith.constant 127 : i32
    %2 = tpu.dynamic_rotate %0 by %c127_i32 dim 1 : vector<128x128xf32>, i32 -> vector<128x128xf32>
    %3 = tpu.iota {dimensions = array<i32: 1>} : vector<128x128xi32>
    %c127_i32_3 = arith.constant 127 : i32
    %4 = vector.broadcast %c127_i32_3 : i32 to vector<128x128xi32>
    %5 = arith.cmpi eq, %3, %4 : vector<128x128xi32>
    %6 = arith.subf %2, %0 : vector<128x128xf32>
    %cst = arith.constant 1.000000e+10 : f32
    %7 = vector.broadcast %cst : f32 to vector<128x128xf32>
    %8 = arith.select %5, %7, %6 : vector<128x128xi1>, vector<128x128xf32>
    %cst_4 = arith.constant 0.000000e+00 : f32
    %9 = vector.broadcast %cst_4 : f32 to vector<128x128xf32>
    %10 = arith.subf %9, %1 : vector<128x128xf32>
    %11 = math.absf %10 : vector<128x128xf32>
    %cst_5 = arith.constant 0.000000e+00 : f32
    %12 = vector.broadcast %cst_5 : f32 to vector<128x128xf32>
    %13 = arith.subf %12, %11 : vector<128x128xf32>
    %cst_6 = arith.constant 2.000000e+00 : f32
    %14 = vector.broadcast %cst_6 : f32 to vector<128x128xf32>
    %15 = arith.mulf %13, %14 : vector<128x128xf32>
    %16 = math.exp %15 : vector<128x128xf32>
    %cst_7 = arith.constant 0.000000e+00 : f32
    %17 = vector.broadcast %cst_7 : f32 to vector<128x128xf32>
    %18 = arith.cmpf ole, %10, %17 : vector<128x128xf32>
    %cst_8 = arith.constant 5.000000e-01 : f32
    %19 = vector.broadcast %cst_8 : f32 to vector<128x128xf32>
    %20 = arith.mulf %19, %16 : vector<128x128xf32>
    %cst_9 = arith.constant 5.000000e-01 : f32
    %21 = vector.broadcast %cst_9 : f32 to vector<128x128xf32>
    %22 = arith.mulf %21, %16 : vector<128x128xf32>
    %cst_10 = arith.constant 1.000000e+00 : f32
    %23 = vector.broadcast %cst_10 : f32 to vector<128x128xf32>
    %24 = arith.subf %23, %22 : vector<128x128xf32>
    %25 = arith.select %18, %20, %24 : vector<128x128xi1>, vector<128x128xf32>
    %cst_11 = arith.constant 1.000000e+01 : f32
    %26 = vector.broadcast %cst_11 : f32 to vector<128x128xf32>
    %27 = arith.mulf %26, %25 : vector<128x128xf32>
    %cst_12 = arith.constant 0.000000e+00 : f32
    %28 = vector.broadcast %cst_12 : f32 to vector<128x128xf32>
    %29 = arith.subf %28, %27 : vector<128x128xf32>
    %30 = arith.mulf %29, %8 : vector<128x128xf32>
    %c0_13 = arith.constant 0 : index
    %c0_14 = arith.constant 0 : index
    %31 = vector.load %arg1[%c0_13, %c0_14] : memref<128x128xf32, #tpu.memory_space<vmem>>, vector<128x128xf32>
    %32 = arith.truncf %30 : vector<128x128xf32> to vector<128x128xbf16>
    %33 = arith.extf %32 : vector<128x128xbf16> to vector<128x128xf32>
    %34 = arith.subf %30, %33 : vector<128x128xf32>
    %cst_15 = arith.constant dense<0.000000e+00> : vector<128x128xf32>
    %35 = tpu.matmul %33, %31, %cst_15 {dimension_numbers = #tpu.dot_dimension_numbers<[1], [0], [0], [1], [0, 0, 1, 1], [], []>} : vector<128x128xf32>, vector<128x128xf32>, vector<128x128xf32> -> vector<128x128xf32>
    %cst_16 = arith.constant dense<0.000000e+00> : vector<128x128xf32>
    %36 = tpu.matmul %34, %31, %cst_16 {dimension_numbers = #tpu.dot_dimension_numbers<[1], [0], [0], [1], [0, 0, 1, 1], [], []>} : vector<128x128xf32>, vector<128x128xf32>, vector<128x128xf32> -> vector<128x128xf32>
    %37 = arith.addf %35, %36 : vector<128x128xf32>
    %38 = math.exp %37 : vector<128x128xf32>
    %39 = math.exp %30 : vector<128x128xf32>
    %cst_17 = arith.constant 1.000000e+00 : f32
    %40 = vector.broadcast %cst_17 : f32 to vector<128x128xf32>
    %41 = arith.subf %40, %39 : vector<128x128xf32>
    %42 = arith.mulf %38, %41 : vector<128x128xf32>
    %c0_18 = arith.constant 0 : index
    %c0_19 = arith.constant 0 : index
    %43 = vector.load %arg2[%c0_18, %c0_19] : memref<128x384xf32, #tpu.memory_space<vmem>>, vector<128x384xf32>
    %44 = arith.truncf %42 : vector<128x128xf32> to vector<128x128xbf16>
    %45 = arith.extf %44 : vector<128x128xbf16> to vector<128x128xf32>
    %46 = arith.subf %42, %45 : vector<128x128xf32>
    %cst_20 = arith.constant dense<0.000000e+00> : vector<128x384xf32>
    %47 = tpu.matmul %45, %43, %cst_20 {dimension_numbers = #tpu.dot_dimension_numbers<[1], [0], [0], [1], [0, 0, 1, 1], [], []>} : vector<128x128xf32>, vector<128x384xf32>, vector<128x384xf32> -> vector<128x384xf32>
    %cst_21 = arith.constant dense<0.000000e+00> : vector<128x384xf32>
    %48 = tpu.matmul %46, %43, %cst_21 {dimension_numbers = #tpu.dot_dimension_numbers<[1], [0], [0], [1], [0, 0, 1, 1], [], []>} : vector<128x128xf32>, vector<128x384xf32>, vector<128x384xf32> -> vector<128x384xf32>
    %49 = arith.addf %47, %48 : vector<128x384xf32>
    %c0_22 = arith.constant 0 : index
    %c0_23 = arith.constant 0 : index
    %50 = vector.load %arg6[%c0_22, %c0_23] : memref<128x384xf32, #tpu.memory_space<vmem>>, vector<128x384xf32>
    %51 = arith.mulf %49, %50 : vector<128x384xf32>
    %c0_24 = arith.constant 0 : index
    %c0_25 = arith.constant 0 : index
    %52 = vector.load %arg3[%c0_24, %c0_25] : memref<3x384xf32, #tpu.memory_space<vmem>>, vector<3x384xf32>
    %53 = vector.extract_strided_slice %52 {offsets = [0, 0], sizes = [1, 384], strides = [1, 1]} : vector<3x384xf32> to vector<1x384xf32>
    %54 = vector.broadcast %53 : vector<1x384xf32> to vector<128x384xf32>
    %55 = arith.mulf %51, %54 : vector<128x384xf32>
    %cst_26 = arith.constant dense<0.000000e+00> : vector<128xf32>
    %56 = vector.multi_reduction <add>, %55, %cst_26 [1] : vector<128x384xf32> to vector<128xf32>
    %57 = vector.shape_cast %56 : vector<128xf32> to vector<128x1xf32>
    %58 = vector.extract_strided_slice %52 {offsets = [1, 0], sizes = [1, 384], strides = [1, 1]} : vector<3x384xf32> to vector<1x384xf32>
    %59 = vector.broadcast %58 : vector<1x384xf32> to vector<128x384xf32>
    %60 = arith.mulf %51, %59 : vector<128x384xf32>
    %cst_27 = arith.constant dense<0.000000e+00> : vector<128xf32>
    %61 = vector.multi_reduction <add>, %60, %cst_27 [1] : vector<128x384xf32> to vector<128xf32>
    %62 = vector.shape_cast %61 : vector<128xf32> to vector<128x1xf32>
    %63 = vector.extract_strided_slice %52 {offsets = [2, 0], sizes = [1, 384], strides = [1, 1]} : vector<3x384xf32> to vector<1x384xf32>
    %64 = vector.broadcast %63 : vector<1x384xf32> to vector<128x384xf32>
    %65 = arith.mulf %51, %64 : vector<128x384xf32>
    %cst_28 = arith.constant dense<0.000000e+00> : vector<128xf32>
    %66 = vector.multi_reduction <add>, %65, %cst_28 [1] : vector<128x384xf32> to vector<128xf32>
    %67 = vector.shape_cast %66 : vector<128xf32> to vector<128x1xf32>
    %68 = tpu.concatenate %57, %62, %67 in 1 : vector<128x1xf32>, vector<128x1xf32>, vector<128x1xf32> -> vector<128x3xf32>
    %c0_29 = arith.constant 0 : index
    %c0_30 = arith.constant 0 : index
    %69 = vector.load %arg7[%c0_29, %c0_30] : memref<128x3xf32, #tpu.memory_space<vmem>>, vector<128x3xf32>
    tpu.vector_store %arg7[%c0_29, %c0_30], %68 {strides = array<i32>} : memref<128x3xf32, #tpu.memory_space<vmem>>, vector<128x3xf32>,
    return
  }
  func.func @transform_0(%arg0: i32) -> (i32, i32) {
    %c0_i32 = arith.constant 0 : i32
    %c0_i32_0 = arith.constant 0 : i32
    %c0_i32_1 = arith.constant 0 : i32
    return %c0_i32, %c0_i32_0 : i32, i32
  }
  func.func @transform_1(%arg0: i32) -> (i32, i32) {
    %c0_i32 = arith.constant 0 : i32
    %c0_i32_0 = arith.constant 0 : i32
    %c0_i32_1 = arith.constant 0 : i32
    return %c0_i32, %c0_i32_0 : i32, i32
  }
  func.func @transform_2(%arg0: i32) -> (i32, i32) {
    %c0_i32 = arith.constant 0 : i32
    %c0_i32_0 = arith.constant 0 : i32
    %c0_i32_1 = arith.constant 0 : i32
    return %c0_i32, %c0_i32_0 : i32, i32
  }
  func.func @transform_3(%arg0: i32) -> (i32, i32) {
    %c0_i32 = arith.constant 0 : i32
    %c0_i32_0 = arith.constant 0 : i32
    return %arg0, %c0_i32 : i32, i32
  }
  func.func @transform_4(%arg0: i32) -> (i32, i32) {
    %c0_i32 = arith.constant 0 : i32
    %c0_i32_0 = arith.constant 0 : i32
    return %arg0, %c0_i32 : i32, i32
  }
  func.func @transform_5(%arg0: i32) -> (i32, i32) {
    %c0_i32 = arith.constant 0 : i32
    %c0_i32_0 = arith.constant 0 : i32
    return %arg0, %c0_i32 : i32, i32
  }
  func.func @transform_6(%arg0: i32) -> (i32, i32) {
    %c0_i32 = arith.constant 0 : i32
    %c0_i32_0 = arith.constant 0 : i32
    return %arg0, %c0_i32 : i32, i32
  }
}

</mosaic_0001>

<llo_original>
// kernel: tpu_custom_call.1
$region0: #{tpu_custom_call.1}
  #allocation0 [shape = 'u32[]', space=smem, size = 0x4, offset = 0x4, fixed_abs, tag = 'smem constant byte address 0x4 - core index']
  #allocation1 [shape = 'u32[144,128]{1,0:T(1,128)}', space=vmem, size = 0x12000, scoped, tag = 'internal scratch']
  %s0 = inlined_call_operand.hbm [shape: f32[128,128], index: 0, kind: input, shape index: {}]
  %s1 = inlined_call_operand.hbm [shape: f32[128,384], index: 1, kind: input, shape index: {}]
  %s2 = inlined_call_operand.hbm [shape: f32[3,384], index: 2, kind: input, shape index: {}]
  %s3 = inlined_call_operand.hbm [shape: f32[200,128], index: 3, kind: input, shape index: {}]
  %s4 = inlined_call_operand.hbm [shape: f32[200,128], index: 4, kind: input, shape index: {}]
  %s5 = inlined_call_operand.hbm [shape: f32[200,384], index: 5, kind: input, shape index: {}]
  %s6 = inlined_call_operand.vmem [shape: f32[200,3], index: 6, kind: output, shape index: {}]
  %s7 = sld [smem:[#allocation0]]
  $region129: #{tpu_custom_call.1} parent=0
    _
  %s9 = ssub.s32 1, %s7
  %s10 = scalar_select 0, %s9, %s7
  $region1: #{tpu_custom_call.1} parent=0
    #allocation2 [shape = 'u8[65536]{0}', space=vmem, size = 0x10000, scoped, tag = 'input window, operand 0, single buffered']
    #allocation3 [shape = 's32[2]{0}', space=sflag, size = 0x8, scoped, tag = 'scoped memory for tpu_custom_call.1']
    #allocation4 [shape = 'u8[196608]{0}', space=vmem, size = 0x30000, scoped, tag = 'input window, operand 1, single buffered']
    #allocation5 [shape = 's32[1]{0}', space=sflag, size = 0x4, scoped, tag = 'scoped memory for tpu_custom_call.1']
    #allocation6 [shape = 'u8[6144]{0}', space=vmem, size = 0x1800, scoped, tag = 'input window, operand 2, single buffered']
    #allocation7 [shape = 'u8[131072]{0}', space=vmem, size = 0x20000, scoped, tag = 'input window, operand 3']
    #allocation8 [shape = 's32[2]{0}', space=sflag, size = 0x8, scoped, tag = 'scoped memory for tpu_custom_call.1']
    #allocation9 [shape = 'u8[131072]{0}', space=vmem, size = 0x20000, scoped, tag = 'input window, operand 4']
    #allocation10 [shape = 'u8[393216]{0}', space=vmem, size = 0x60000, scoped, tag = 'input window, operand 5']
    #allocation11 [shape = 's32[2]{0}', space=sflag, size = 0x8, scoped, tag = 'scoped memory for tpu_custom_call.1']
    #allocation12 [shape = 'u8[131072]{0}', space=vmem, size = 0x20000, scoped, tag = 'output window, operand 0']
    %11 = vsyncpa [#allocation3], 0
    %12 = vsyncpa [#allocation5], 0
    %13 = vsyncpa [#allocation8], 0
    %s14 = scalar_lea.sflag [#allocation8], 1
    %15 = vsyncpa %s14, 0
    %16 = vsyncpa [#allocation11], 0
    %s17 = scalar_lea.sflag [#allocation11], 1
    %18 = vsyncpa %s17, 0
    loop: start=0, step=1, limit=4
    $region2: #{tpu_custom_call.1} parent=1 // loop_pre_header
      _
    $region3: #{tpu_custom_call.1} parent=1 // loop_header
      %s20 = sphi 0, %s24
      %p21 = scmp.ge.s32.totalorder %s20, 4
      %s28 = sphi 0, %s28
      %s30 = sphi 0, %s28
      %s31 = sphi 0, %s30
      %s45 = sphi 0, %s31
      %s49 = sphi 0, %s49
      %s51 = sphi 0, %s49
      %s52 = sphi 0, %s51
      %s66 = sphi 0, %s52
      %s70 = sphi 0, %s70
      %s72 = sphi 0, %s70
      %s73 = sphi 0, %s72
      %s87 = sphi 0, %s73
      %s93 = sphi 0, %s95
      %s96 = sphi 0, %s93
      %s97 = sphi 0, %s96
      %s113 = sphi 0, %s97
      %s119 = sphi 0, %s121
      %s122 = sphi 0, %s119
      %s123 = sphi 0, %s122
      %s139 = sphi 0, %s123
      %s145 = sphi 0, %s147
      %s148 = sphi 0, %s145
      %s149 = sphi 0, %s148
      %s165 = sphi 0, %s149
      %s171 = sphi 0, %s173
      %s174 = sphi 0, %s171
      %s175 = sphi 0, %s174
      %s191 = sphi 0, %s175
    $region4: #{tpu_custom_call.1} parent=1 // loop_header_branch
      %23 = sbr.rel (%p21) target = $region8
    $region5: #{tpu_custom_call.1} parent=1 // loop_body
      %s25 = ssub.s32 %s20, 1
      %s26 = ssub.s32 %s20, 2
      %s27 = sadd.s32 %s20, 1
      %s29 = sadd.s32 %s28, 1
      %p32 = scmp.eq.s32.totalorder %s20, 1
      %p33 = scmp.ne.s32.totalorder %s28, %s30
      %p34 = scmp.eq.s32.totalorder %s20, 0
      %p35 = por %p33, %p34
      %p36 = scmp.ne.s32.totalorder %s28, %s30
      %p37 = scmp.eq.s32.totalorder %s25, 1
      %p38 = por %p36, %p37
      %p39 = scmp.ne.s32.totalorder %s30, %s31
      %p40 = scmp.eq.s32.totalorder %s25, 0
      %p41 = por %p39, %p40
      %p42 = scmp.ne.s32.totalorder %s30, %s31
      %p43 = scmp.eq.s32.totalorder %s26, 1
      %p44 = por %p42, %p43
      %p46 = scmp.ne.s32.totalorder %s31, %s45
      %p47 = scmp.eq.s32.totalorder %s26, 0
      %p48 = por %p46, %p47
      %s50 = sadd.s32 %s49, 1
      %p53 = scmp.eq.s32.totalorder %s20, 1
      %p54 = scmp.ne.s32.totalorder %s49, %s51
      %p55 = scmp.eq.s32.totalorder %s20, 0
      %p56 = por %p54, %p55
      %p57 = scmp.ne.s32.totalorder %s49, %s51
      %p58 = scmp.eq.s32.totalorder %s25, 1
      %p59 = por %p57, %p58
      %p60 = scmp.ne.s32.totalorder %s51, %s52
      %p61 = scmp.eq.s32.totalorder %s25, 0
      %p62 = por %p60, %p61
      %p63 = scmp.ne.s32.totalorder %s51, %s52
      %p64 = scmp.eq.s32.totalorder %s26, 1
      %p65 = por %p63, %p64
      %p67 = scmp.ne.s32.totalorder %s52, %s66
      %p68 = scmp.eq.s32.totalorder %s26, 0
      %p69 = por %p67, %p68
      %s71 = sadd.s32 %s70, 1
      %p74 = scmp.eq.s32.totalorder %s20, 1
      %p75 = scmp.ne.s32.totalorder %s70, %s72
      %p76 = scmp.eq.s32.totalorder %s20, 0
      %p77 = por %p75, %p76
      %p78 = scmp.ne.s32.totalorder %s70, %s72
      %p79 = scmp.eq.s32.totalorder %s25, 1
      %p80 = por %p78, %p79
      %p81 = scmp.ne.s32.totalorder %s72, %s73
      %p82 = scmp.eq.s32.totalorder %s25, 0
      %p83 = por %p81, %p82
      %p84 = scmp.ne.s32.totalorder %s72, %s73
      %p85 = scmp.eq.s32.totalorder %s26, 1
      %p86 = por %p84, %p85
      %p88 = scmp.ne.s32.totalorder %s73, %s87
      %p89 = scmp.eq.s32.totalorder %s26, 0
      %p90 = por %p88, %p89
      %s91 = ssub.s32 %s20, %s27
      %p92 = scmp.eq.s32.totalorder %s91, 0
      %s94 = sadd.s32 %s93, 1
      %s95 = scalar_select %p92, %s93, %s94
      %p98 = pneg %p92
      %p99 = scmp.eq.s32.totalorder %s20, 1
      %p100 = por %p98, %p99
      %p101 = scmp.ne.s32.totalorder %s93, %s96
      %p102 = scmp.eq.s32.totalorder %s20, 0
      %p103 = por %p101, %p102
      %p104 = scmp.ne.s32.totalorder %s93, %s96
      %p105 = scmp.eq.s32.totalorder %s25, 1
      %p106 = por %p104, %p105
      %p107 = scmp.ne.s32.totalorder %s96, %s97
      %p108 = scmp.eq.s32.totalorder %s25, 0
      %p109 = por %p107, %p108
      %p110 = scmp.ne.s32.totalorder %s96, %s97
      %p111 = scmp.eq.s32.totalorder %s26, 1
      %p112 = por %p110, %p111
      %p114 = scmp.ne.s32.totalorder %s97, %s113
      %p115 = scmp.eq.s32.totalorder %s26, 0
      %p116 = por %p114, %p115
      %s117 = ssub.s32 %s20, %s27
      %p118 = scmp.eq.s32.totalorder %s117, 0
      %s120 = sadd.s32 %s119, 1
      %s121 = scalar_select %p118, %s119, %s120
      %p124 = pneg %p118
      %p125 = scmp.eq.s32.totalorder %s20, 1
      %p126 = por %p124, %p125
      %p127 = scmp.ne.s32.totalorder %s119, %s122
      %p128 = scmp.eq.s32.totalorder %s20, 0
      %p129 = por %p127, %p128
      %p130 = scmp.ne.s32.totalorder %s119, %s122
      %p131 = scmp.eq.s32.totalorder %s25, 1
      %p132 = por %p130, %p131
      %p133 = scmp.ne.s32.totalorder %s122, %s123
      %p134 = scmp.eq.s32.totalorder %s25, 0
      %p135 = por %p133, %p134
      %p136 = scmp.ne.s32.totalorder %s122, %s123
      %p137 = scmp.eq.s32.totalorder %s26, 1
      %p138 = por %p136, %p137
      %p140 = scmp.ne.s32.totalorder %s123, %s139
      %p141 = scmp.eq.s32.totalorder %s26, 0
      %p142 = por %p140, %p141
      %s143 = ssub.s32 %s20, %s27
      %p144 = scmp.eq.s32.totalorder %s143, 0
      %s146 = sadd.s32 %s145, 1
      %s147 = scalar_select %p144, %s145, %s146
      %p150 = pneg %p144
      %p151 = scmp.eq.s32.totalorder %s20, 1
      %p152 = por %p150, %p151
      %p153 = scmp.ne.s32.totalorder %s145, %s148
      %p154 = scmp.eq.s32.totalorder %s20, 0
      %p155 = por %p153, %p154
      %p156 = scmp.ne.s32.totalorder %s145, %s148
      %p157 = scmp.eq.s32.totalorder %s25, 1
      %p158 = por %p156, %p157
      %p159 = scmp.ne.s32.totalorder %s148, %s149
      %p160 = scmp.eq.s32.totalorder %s25, 0
      %p161 = por %p159, %p160
      %p162 = scmp.ne.s32.totalorder %s148, %s149
      %p163 = scmp.eq.s32.totalorder %s26, 1
      %p164 = por %p162, %p163
      %p166 = scmp.ne.s32.totalorder %s149, %s165
      %p167 = scmp.eq.s32.totalorder %s26, 0
      %p168 = por %p166, %p167
      %s169 = ssub.s32 %s20, %s27
      %p170 = scmp.eq.s32.totalorder %s169, 0
      %s172 = sadd.s32 %s171, 1
      %s173 = scalar_select %p170, %s171, %s172
      %p176 = pneg %p170
      %p177 = scmp.eq.s32.totalorder %s20, 1
      %p178 = por %p176, %p177
      %p179 = scmp.ne.s32.totalorder %s171, %s174
      %p180 = scmp.eq.s32.totalorder %s20, 0
      %p181 = por %p179, %p180
      %p182 = scmp.ne.s32.totalorder %s171, %s174
      %p183 = scmp.eq.s32.totalorder %s25, 1
      %p184 = por %p182, %p183
      %p185 = scmp.ne.s32.totalorder %s174, %s175
      %p186 = scmp.eq.s32.totalorder %s25, 0
      %p187 = por %p185, %p186
      %p188 = scmp.ne.s32.totalorder %s174, %s175
      %p189 = scmp.eq.s32.totalorder %s26, 1
      %p190 = por %p188, %p189
      %p192 = scmp.ne.s32.totalorder %s175, %s191
      %p193 = scmp.eq.s32.totalorder %s26, 0
      %p194 = por %p192, %p193
      %p195 = scmp.le.s32.totalorder 1, %s20
      %p196 = scmp.lt.s32.totalorder %s20, 3
      %p197 = pnand %p195, %p196
      %p198 = pneg %p197
      // Predicated region
      $region9: #{tpu_custom_call.1} parent=5 // pred_check
        _
      $region10: #{tpu_custom_call.1} parent=5 // pred_check_branch
        %200 = sbr.rel (%p197) target = $region12
      $region11: #{tpu_custom_call.1} parent=5 // pred_region
        %s201 = ssub.s32 %s20, 1
        // Predicated region
        $region13: #{tpu_custom_call.1} parent=11 // pred_check
          %p202 = pneg %p41
        $region14: #{tpu_custom_call.1} parent=11 // pred_check_branch
          %204 = sbr.rel (%p202) target = $region16
        $region15: #{tpu_custom_call.1} parent=11 // pred_region
          %s206 = ssub.s32 2048, 2048
          %207 = vsyncadd [#allocation3], %s206
          %s208 = sshll.u32 [#allocation2], 4
          %s209 = int_to_ptr.vmem [resolvable:$true] %s208
          %214 = dma.hbm_to_vmem [thread:$0]  %s0, 2048, %s209, [#allocation3], 128, 128, 8
        $region16: #{tpu_custom_call.1} parent=11 // pred_fallthru
          _
        // Predicated region
        $region17: #{tpu_custom_call.1} parent=11 // pred_check
          %p215 = pneg %p62
        $region18: #{tpu_custom_call.1} parent=11 // pred_check_branch
          %217 = sbr.rel (%p215) target = $region20
        $region19: #{tpu_custom_call.1} parent=11 // pred_region
          %s219 = ssub.s32 6144, 6144
          %220 = vsyncadd [#allocation5], %s219
          %s221 = sshll.u32 [#allocation4], 4
          %s222 = int_to_ptr.vmem [resolvable:$true] %s221
          %227 = dma.hbm_to_vmem [thread:$0]  %s1, 6144, %s222, [#allocation5], 384, 384, 24
        $region20: #{tpu_custom_call.1} parent=11 // pred_fallthru
          _
        // Predicated region
        $region21: #{tpu_custom_call.1} parent=11 // pred_check
          %p228 = pneg %p83
        $region22: #{tpu_custom_call.1} parent=11 // pred_check_branch
          %230 = sbr.rel (%p228) target = $region24
        $region23: #{tpu_custom_call.1} parent=11 // pred_region
          %s232 = ssub.s32 192, 192
          %233 = vsyncadd [#allocation5], %s232
          %s235 = sshll.u32 [#allocation6], 4
          %s236 = int_to_ptr.vmem [resolvable:$true] %s235
          %238 = dma.hbm_to_vmem [thread:$0]  %s2, 192, %s236, [#allocation5]
        $region24: #{tpu_custom_call.1} parent=11 // pred_fallthru
          _
      $region12: #{tpu_custom_call.1} parent=5 // pred_fallthru
        _
      %p239 = scmp.lt.s32.totalorder %s20, 2
      // Predicated region
      $region25: #{tpu_custom_call.1} parent=5 // pred_check
        %p240 = pneg %p239
      $region26: #{tpu_custom_call.1} parent=5 // pred_check_branch
        %242 = sbr.rel (%p240) target = $region28
      $region27: #{tpu_custom_call.1} parent=5 // pred_region
        // Predicated region
        $region29: #{tpu_custom_call.1} parent=27 // pred_check
          %p243 = pneg %p103
        $region30: #{tpu_custom_call.1} parent=27 // pred_check_branch
          %245 = sbr.rel (%p243) target = $region32
        $region31: #{tpu_custom_call.1} parent=27 // pred_region
          %s246 = sand.u32 %s20, 1
          %s247 = scalar_lea.sflag [#allocation8], %s246
          %s248 = sand.u32 %s93, 1
          %s249 = smul.addr %s248, 128
          %s250 = scalar_lea.vmem [#allocation7], %s249
          %s251 = smul.u32 16, %s20
          %s252 = ssub.s32 25, %s251
          %p253 = scmp.lt.s32.totalorder %s252, 16
          %s254 = scalar_select %p253, %s252, 16
          %s255 = smul.u32 128, %s254
          %s257 = ssub.s32 2048, %s255
          %258 = vsyncadd %s247, %s257
          %p259 = scmp.ne.s32.totalorder 0, %s255
          %s260 = smul.addr %s251, 128
          %s261 = scalar_lea.hbm %s3, %s260
          %s262 = smul.u32 8, %s254
          %s263 = sshll.u32 %s250, 4
          %s264 = int_to_ptr.vmem [resolvable:$true] %s263
          %s265 = sshll.u32 %s262, 4
          %269 = dma.hbm_to_vmem [thread:$0]  (%p259), %s261, %s265, %s264, %s247, 128, 128, 8
        $region32: #{tpu_custom_call.1} parent=27 // pred_fallthru
          _
        // Predicated region
        $region33: #{tpu_custom_call.1} parent=27 // pred_check
          %p270 = pneg %p129
        $region34: #{tpu_custom_call.1} parent=27 // pred_check_branch
          %272 = sbr.rel (%p270) target = $region36
        $region35: #{tpu_custom_call.1} parent=27 // pred_region
          %s273 = sand.u32 %s20, 1
          %s274 = scalar_lea.sflag [#allocation8], %s273
          %s275 = sand.u32 %s119, 1
          %s276 = smul.addr %s275, 128
          %s277 = scalar_lea.vmem [#allocation9], %s276
          %s278 = smul.u32 16, %s20
          %s279 = ssub.s32 25, %s278
          %p280 = scmp.lt.s32.totalorder %s279, 16
          %s281 = scalar_select %p280, %s279, 16
          %s282 = smul.u32 128, %s281
          %s284 = ssub.s32 2048, %s282
          %285 = vsyncadd %s274, %s284
          %p286 = scmp.ne.s32.totalorder 0, %s282
          %s287 = smul.addr %s278, 128
          %s288 = scalar_lea.hbm %s4, %s287
          %s289 = smul.u32 8, %s281
          %s290 = sshll.u32 %s277, 4
          %s291 = int_to_ptr.vmem [resolvable:$true] %s290
          %s292 = sshll.u32 %s289, 4
          %296 = dma.hbm_to_vmem [thread:$0]  (%p286), %s288, %s292, %s291, %s274, 128, 128, 8
        $region36: #{tpu_custom_call.1} parent=27 // pred_fallthru
          _
        // Predicated region
        $region37: #{tpu_custom_call.1} parent=27 // pred_check
          %p297 = pneg %p155
        $region38: #{tpu_custom_call.1} parent=27 // pred_check_branch
          %299 = sbr.rel (%p297) target = $region40
        $region39: #{tpu_custom_call.1} parent=27 // pred_region
          %s300 = sand.u32 %s145, 1
          %s301 = scalar_lea.sflag [#allocation11], %s300
          %s302 = sand.u32 %s145, 1
          %s303 = smul.addr %s302, 384
          %s304 = scalar_lea.vmem [#allocation10], %s303
          %s305 = smul.u32 16, %s20
          %s306 = ssub.s32 25, %s305
          %p307 = scmp.lt.s32.totalorder %s306, 16
          %s308 = scalar_select %p307, %s306, 16
          %s309 = smul.u32 128, %s308
          %s310 = smul.u32 %s309, 3
          %s312 = ssub.s32 6144, %s310
          %313 = vsyncadd %s301, %s312
          %p314 = scmp.ne.s32.totalorder 0, %s310
          %s315 = smul.addr %s305, 3
          %s316 = smul.addr %s315, 128
          %s317 = scalar_lea.hbm %s5, %s316
          %s318 = smul.u32 24, %s308
          %s319 = sshll.u32 %s304, 4
          %s320 = int_to_ptr.vmem [resolvable:$true] %s319
          %s321 = sshll.u32 %s318, 4
          %325 = dma.hbm_to_vmem [thread:$0]  (%p314), %s317, %s321, %s320, %s301, 384, 384, 24
        $region40: #{tpu_custom_call.1} parent=27 // pred_fallthru
          _
      $region28: #{tpu_custom_call.1} parent=5 // pred_fallthru
        _
      %p326 = scmp.le.s32.totalorder 1, %s20
      %p327 = scmp.lt.s32.totalorder %s20, 3
      %p328 = pnand %p326, %p327
      %p329 = pneg %p328
      // Predicated region
      $region41: #{tpu_custom_call.1} parent=5 // pred_check
        _
      $region42: #{tpu_custom_call.1} parent=5 // pred_check_branch
        %331 = sbr.rel (%p328) target = $region44
      $region43: #{tpu_custom_call.1} parent=5 // pred_region
        %s332 = ssub.s32 %s20, 1
        // Predicated region
        $region45: #{tpu_custom_call.1} parent=43 // pred_check
          %p333 = pneg %p41
        $region46: #{tpu_custom_call.1} parent=43 // pred_check_branch
          %335 = sbr.rel (%p333) target = $region48
        $region47: #{tpu_custom_call.1} parent=43 // pred_region
          %336 = dma.done [#allocation3], 2048
        $region48: #{tpu_custom_call.1} parent=43 // pred_fallthru
          _
        // Predicated region
        $region49: #{tpu_custom_call.1} parent=43 // pred_check
          %p337 = pneg %p62
        $region50: #{tpu_custom_call.1} parent=43 // pred_check_branch
          %339 = sbr.rel (%p337) target = $region52
        $region51: #{tpu_custom_call.1} parent=43 // pred_region
          %340 = dma.done [#allocation5], 6144
        $region52: #{tpu_custom_call.1} parent=43 // pred_fallthru
          _
        // Predicated region
        $region53: #{tpu_custom_call.1} parent=43 // pred_check
          %p341 = pneg %p83
        $region54: #{tpu_custom_call.1} parent=43 // pred_check_branch
          %343 = sbr.rel (%p341) target = $region56
        $region55: #{tpu_custom_call.1} parent=43 // pred_region
          %344 = dma.done [#allocation5], 192
        $region56: #{tpu_custom_call.1} parent=43 // pred_fallthru
          _
        %s345 = sand.u32 %s25, 1
        %s346 = scalar_lea.sflag [#allocation8], %s345
        %s347 = sand.u32 %s96, 1
        %s348 = smul.addr %s347, 128
        %s349 = scalar_lea.vmem [#allocation7], %s348
        // Predicated region
        $region57: #{tpu_custom_call.1} parent=43 // pred_check
          %p350 = pneg %p109
        $region58: #{tpu_custom_call.1} parent=43 // pred_check_branch
          %352 = sbr.rel (%p350) target = $region60
        $region59: #{tpu_custom_call.1} parent=43 // pred_region
          %353 = dma.done %s346, 2048
        $region60: #{tpu_custom_call.1} parent=43 // pred_fallthru
          _
        %s354 = sand.u32 %s25, 1
        %s355 = scalar_lea.sflag [#allocation8], %s354
        %s356 = sand.u32 %s122, 1
        %s357 = smul.addr %s356, 128
        %s358 = scalar_lea.vmem [#allocation9], %s357
        // Predicated region
        $region61: #{tpu_custom_call.1} parent=43 // pred_check
          %p359 = pneg %p135
        $region62: #{tpu_custom_call.1} parent=43 // pred_check_branch
          %361 = sbr.rel (%p359) target = $region64
        $region63: #{tpu_custom_call.1} parent=43 // pred_region
          %362 = dma.done %s355, 2048
        $region64: #{tpu_custom_call.1} parent=43 // pred_fallthru
          _
        %s363 = sand.u32 %s148, 1
        %s364 = scalar_lea.sflag [#allocation11], %s363
        %s365 = sand.u32 %s148, 1
        %s366 = smul.addr %s365, 384
        %s367 = scalar_lea.vmem [#allocation10], %s366
        // Predicated region
        $region65: #{tpu_custom_call.1} parent=43 // pred_check
          %p368 = pneg %p161
        $region66: #{tpu_custom_call.1} parent=43 // pred_check_branch
          %370 = sbr.rel (%p368) target = $region68
        $region67: #{tpu_custom_call.1} parent=43 // pred_region
          %371 = dma.done %s364, 6144
        $region68: #{tpu_custom_call.1} parent=43 // pred_fallthru
          _
        %p372 = pneg %p41
        %p373 = pneg %p38
        %p374 = pneg %p62
        %p375 = pneg %p59
        %p376 = pneg %p83
        %p377 = pneg %p80
        %s378 = sand.u32 %s25, 1
        %s379 = scalar_lea.sflag [#allocation8], %s378
        %s380 = sand.u32 %s96, 1
        %s381 = smul.addr %s380, 128
        %s382 = scalar_lea.vmem [#allocation7], %s381
        %p383 = pneg %p109
        %p384 = pneg %p106
        %s385 = sand.u32 %s25, 1
        %s386 = scalar_lea.sflag [#allocation8], %s385
        %s387 = sand.u32 %s122, 1
        %s388 = smul.addr %s387, 128
        %s389 = scalar_lea.vmem [#allocation9], %s388
        %p390 = pneg %p135
        %p391 = pneg %p132
        %s392 = sand.u32 %s148, 1
        %s393 = scalar_lea.sflag [#allocation11], %s392
        %s394 = sand.u32 %s148, 1
        %s395 = smul.addr %s394, 384
        %s396 = scalar_lea.vmem [#allocation10], %s395
        %p397 = pneg %p161
        %p398 = pneg %p158
        %p399 = pneg %p187
        %p400 = pneg %p184
        %s401 = sand.u32 %s174, 1
        %s402 = sand.u32 %s174, 1
        %s403 = smul.addr %s402, 128
        %s404 = scalar_lea.vmem [#allocation12], %s403
        %s405 = smul.u32 16, %s25
        %s406 = ssub.s32 25, %s405
        %p407 = scmp.lt.s32.totalorder %s406, 16
        %s408 = scalar_select %p407, %s406, 16
        %s409 = smul.u32 128, %s408
        %s410 = smul.u32 16, %s25
        %s411 = ssub.s32 25, %s410
        %p412 = scmp.lt.s32.totalorder %s411, 16
        %s413 = scalar_select %p412, %s411, 16
        %s414 = smul.u32 128, %s413
        %s415 = smul.u32 16, %s25
        %s416 = ssub.s32 25, %s415
        %p417 = scmp.lt.s32.totalorder %s416, 16
        %s418 = scalar_select %p417, %s416, 16
        %s419 = smul.u32 128, %s418
        %s420 = smul.u32 %s419, 3
        %s421 = smul.u32 16, %s25
        %s422 = ssub.s32 25, %s421
        %p423 = scmp.lt.s32.totalorder %s422, 16
        %s424 = scalar_select %p423, %s422, 16
        %s425 = smul.u32 128, %s424
        %v426 = vld [vmem:[%s349] sm:$0xff]
        %v427 = vld [vmem:[%s349 + $0x8] sm:$0xff]
        %v428 = vld [vmem:[%s349 + $0x10] sm:$0xff]
        %v429 = vld [vmem:[%s349 + $0x18] sm:$0xff]
        %v430 = vld [vmem:[%s349 + $0x20] sm:$0xff]
        %v431 = vld [vmem:[%s349 + $0x28] sm:$0xff]
        %v432 = vld [vmem:[%s349 + $0x30] sm:$0xff]
        %v433 = vld [vmem:[%s349 + $0x38] sm:$0xff]
        %v434 = vld [vmem:[%s349 + $0x40] sm:$0xff]
        %v435 = vld [vmem:[%s349 + $0x48] sm:$0xff]
        %v436 = vld [vmem:[%s349 + $0x50] sm:$0xff]
        %v437 = vld [vmem:[%s349 + $0x58] sm:$0xff]
        %v438 = vld [vmem:[%s349 + $0x60] sm:$0xff]
        %v439 = vld [vmem:[%s349 + $0x68] sm:$0xff]
        %v440 = vld [vmem:[%s349 + $0x70] sm:$0xff]
        %v441 = vld [vmem:[%s349 + $0x78] sm:$0xff]
        %v442 = vld [vmem:[%s358] sm:$0xff]
        %v443 = vld [vmem:[%s358 + $0x8] sm:$0xff]
        %v444 = vld [vmem:[%s358 + $0x10] sm:$0xff]
        %v445 = vld [vmem:[%s358 + $0x18] sm:$0xff]
        %v446 = vld [vmem:[%s358 + $0x20] sm:$0xff]
        %v447 = vld [vmem:[%s358 + $0x28] sm:$0xff]
        %v448 = vld [vmem:[%s358 + $0x30] sm:$0xff]
        %v449 = vld [vmem:[%s358 + $0x38] sm:$0xff]
        %v450 = vld [vmem:[%s358 + $0x40] sm:$0xff]
        %v451 = vld [vmem:[%s358 + $0x48] sm:$0xff]
        %v452 = vld [vmem:[%s358 + $0x50] sm:$0xff]
        %v453 = vld [vmem:[%s358 + $0x58] sm:$0xff]
        %v454 = vld [vmem:[%s358 + $0x60] sm:$0xff]
        %v455 = vld [vmem:[%s358 + $0x68] sm:$0xff]
        %v456 = vld [vmem:[%s358 + $0x70] sm:$0xff]
        %v457 = vld [vmem:[%s358 + $0x78] sm:$0xff]
        %458 = vrot.lane.b32.xlu0 %v426, 127
        %v459 = vpop.permute.xlu0 %458
        %460 = vrot.lane.b32.xlu0 %v427, 127
        %v461 = vpop.permute.xlu0 %460
        %462 = vrot.lane.b32.xlu0 %v428, 127
        %v463 = vpop.permute.xlu0 %462
        %464 = vrot.lane.b32.xlu0 %v429, 127
        %v465 = vpop.permute.xlu0 %464
        %466 = vrot.lane.b32.xlu0 %v430, 127
        %v467 = vpop.permute.xlu0 %466
        %468 = vrot.lane.b32.xlu0 %v431, 127
        %v469 = vpop.permute.xlu0 %468
        %470 = vrot.lane.b32.xlu0 %v432, 127
        %v471 = vpop.permute.xlu0 %470
        %472 = vrot.lane.b32.xlu0 %v433, 127
        %v473 = vpop.permute.xlu0 %472
        %474 = vrot.lane.b32.xlu0 %v434, 127
        %v475 = vpop.permute.xlu0 %474
        %476 = vrot.lane.b32.xlu0 %v435, 127
        %v477 = vpop.permute.xlu0 %476
        %478 = vrot.lane.b32.xlu0 %v436, 127
        %v479 = vpop.permute.xlu0 %478
        %480 = vrot.lane.b32.xlu0 %v437, 127
        %v481 = vpop.permute.xlu0 %480
        %482 = vrot.lane.b32.xlu0 %v438, 127
        %v483 = vpop.permute.xlu0 %482
        %484 = vrot.lane.b32.xlu0 %v439, 127
        %v485 = vpop.permute.xlu0 %484
        %486 = vrot.lane.b32.xlu0 %v440, 127
        %v487 = vpop.permute.xlu0 %486
        %488 = vrot.lane.b32.xlu0 %v441, 127
        %v489 = vpop.permute.xlu0 %488
        %v490 = vlaneseq
        %v491 = vand.u32 %v490, 127
        %vm492 = vcmp.eq.s32.totalorder %v491, 127
        %v493 = vsub.f32 %v459, %v426
        %v494 = vsub.f32 %v461, %v427
        %v495 = vsub.f32 %v463, %v428
        %v496 = vsub.f32 %v465, %v429
        %v497 = vsub.f32 %v467, %v430
        %v498 = vsub.f32 %v469, %v431
        %v499 = vsub.f32 %v471, %v432
        %v500 = vsub.f32 %v473, %v433
        %v501 = vsub.f32 %v475, %v434
        %v502 = vsub.f32 %v477, %v435
        %v503 = vsub.f32 %v479, %v436
        %v504 = vsub.f32 %v481, %v437
        %v505 = vsub.f32 %v483, %v438
        %v506 = vsub.f32 %v485, %v439
        %v507 = vsub.f32 %v487, %v440
        %v508 = vsub.f32 %v489, %v441
        %v509 = vsel %vm492, 1e+10, %v493
        %v510 = vsel %vm492, 1e+10, %v494
        %v511 = vsel %vm492, 1e+10, %v495
        %v512 = vsel %vm492, 1e+10, %v496
        %v513 = vsel %vm492, 1e+10, %v497
        %v514 = vsel %vm492, 1e+10, %v498
        %v515 = vsel %vm492, 1e+10, %v499
        %v516 = vsel %vm492, 1e+10, %v500
        %v517 = vsel %vm492, 1e+10, %v501
        %v518 = vsel %vm492, 1e+10, %v502
        %v519 = vsel %vm492, 1e+10, %v503
        %v520 = vsel %vm492, 1e+10, %v504
        %v521 = vsel %vm492, 1e+10, %v505
        %v522 = vsel %vm492, 1e+10, %v506
        %v523 = vsel %vm492, 1e+10, %v507
        %v524 = vsel %vm492, 1e+10, %v508
        %v525 = vsub.f32 0.0, %v442
        %v526 = vsub.f32 0.0, %v443
        %v527 = vsub.f32 0.0, %v444
        %v528 = vsub.f32 0.0, %v445
        %v529 = vsub.f32 0.0, %v446
        %v530 = vsub.f32 0.0, %v447
        %v531 = vsub.f32 0.0, %v448
        %v532 = vsub.f32 0.0, %v449
        %v533 = vsub.f32 0.0, %v450
        %v534 = vsub.f32 0.0, %v451
        %v535 = vsub.f32 0.0, %v452
        %v536 = vsub.f32 0.0, %v453
        %v537 = vsub.f32 0.0, %v454
        %v538 = vsub.f32 0.0, %v455
        %v539 = vsub.f32 0.0, %v456
        %v540 = vsub.f32 0.0, %v457
        %v541 = vand.u32 2147483647, %v525
        %v542 = vand.u32 2147483647, %v526
        %v543 = vand.u32 2147483647, %v527
        %v544 = vand.u32 2147483647, %v528
        %v545 = vand.u32 2147483647, %v529
        %v546 = vand.u32 2147483647, %v530
        %v547 = vand.u32 2147483647, %v531
        %v548 = vand.u32 2147483647, %v532
        %v549 = vand.u32 2147483647, %v533
        %v550 = vand.u32 2147483647, %v534
        %v551 = vand.u32 2147483647, %v535
        %v552 = vand.u32 2147483647, %v536
        %v553 = vand.u32 2147483647, %v537
        %v554 = vand.u32 2147483647, %v538
        %v555 = vand.u32 2147483647, %v539
        %v556 = vand.u32 2147483647, %v540
        %v557 = vsub.f32 0.0, %v541
        %v558 = vsub.f32 0.0, %v542
        %v559 = vsub.f32 0.0, %v543
        %v560 = vsub.f32 0.0, %v544
        %v561 = vsub.f32 0.0, %v545
        %v562 = vsub.f32 0.0, %v546
        %v563 = vsub.f32 0.0, %v547
        %v564 = vsub.f32 0.0, %v548
        %v565 = vsub.f32 0.0, %v549
        %v566 = vsub.f32 0.0, %v550
        %v567 = vsub.f32 0.0, %v551
        %v568 = vsub.f32 0.0, %v552
        %v569 = vsub.f32 0.0, %v553
        %v570 = vsub.f32 0.0, %v554
        %v571 = vsub.f32 0.0, %v555
        %v572 = vsub.f32 0.0, %v556
        %v573 = vmul.f32 %v557, 2.0
        %v574 = vmul.f32 %v558, 2.0
        %v575 = vmul.f32 %v559, 2.0
        %v576 = vmul.f32 %v560, 2.0
        %v577 = vmul.f32 %v561, 2.0
        %v578 = vmul.f32 %v562, 2.0
        %v579 = vmul.f32 %v563, 2.0
        %v580 = vmul.f32 %v564, 2.0
        %v581 = vmul.f32 %v565, 2.0
        %v582 = vmul.f32 %v566, 2.0
        %v583 = vmul.f32 %v567, 2.0
        %v584 = vmul.f32 %v568, 2.0
        %v585 = vmul.f32 %v569, 2.0
        %v586 = vmul.f32 %v570, 2.0
        %v587 = vmul.f32 %v571, 2.0
        %v588 = vmul.f32 %v572, 2.0
        %v589 = vmul.f32 %v573, 1.442695
        %v590 = vpow.pop %v589
        %v591 = vmul.f32 %v574, 1.442695
        %v592 = vpow.pop %v591
        %v593 = vmul.f32 %v575, 1.442695
        %v594 = vpow.pop %v593
        %v595 = vmul.f32 %v576, 1.442695
        %v596 = vpow.pop %v595
        %v597 = vmul.f32 %v577, 1.442695
        %v598 = vpow.pop %v597
        %v599 = vmul.f32 %v578, 1.442695
        %v600 = vpow.pop %v599
        %v601 = vmul.f32 %v579, 1.442695
        %v602 = vpow.pop %v601
        %v603 = vmul.f32 %v580, 1.442695
        %v604 = vpow.pop %v603
        %v605 = vmul.f32 %v581, 1.442695
        %v606 = vpow.pop %v605
        %v607 = vmul.f32 %v582, 1.442695
        %v608 = vpow.pop %v607
        %v609 = vmul.f32 %v583, 1.442695
        %v610 = vpow.pop %v609
        %v611 = vmul.f32 %v584, 1.442695
        %v612 = vpow.pop %v611
        %v613 = vmul.f32 %v585, 1.442695
        %v614 = vpow.pop %v613
        %v615 = vmul.f32 %v586, 1.442695
        %v616 = vpow.pop %v615
        %v617 = vmul.f32 %v587, 1.442695
        %v618 = vpow.pop %v617
        %v619 = vmul.f32 %v588, 1.442695
        %v620 = vpow.pop %v619
        %vm621 = vcmp.le.f32.partialorder %v525, 0.0
        %vm622 = vcmp.le.f32.partialorder %v526, 0.0
        %vm623 = vcmp.le.f32.partialorder %v527, 0.0
        %vm624 = vcmp.le.f32.partialorder %v528, 0.0
        %vm625 = vcmp.le.f32.partialorder %v529, 0.0
        %vm626 = vcmp.le.f32.partialorder %v530, 0.0
        %vm627 = vcmp.le.f32.partialorder %v531, 0.0
        %vm628 = vcmp.le.f32.partialorder %v532, 0.0
        %vm629 = vcmp.le.f32.partialorder %v533, 0.0
        %vm630 = vcmp.le.f32.partialorder %v534, 0.0
        %vm631 = vcmp.le.f32.partialorder %v535, 0.0
        %vm632 = vcmp.le.f32.partialorder %v536, 0.0
        %vm633 = vcmp.le.f32.partialorder %v537, 0.0
        %vm634 = vcmp.le.f32.partialorder %v538, 0.0
        %vm635 = vcmp.le.f32.partialorder %v539, 0.0
        %vm636 = vcmp.le.f32.partialorder %v540, 0.0
        %v637 = vmul.f32 %v590, 0.5
        %v638 = vmul.f32 %v592, 0.5
        %v639 = vmul.f32 %v594, 0.5
        %v640 = vmul.f32 %v596, 0.5
        %v641 = vmul.f32 %v598, 0.5
        %v642 = vmul.f32 %v600, 0.5
        %v643 = vmul.f32 %v602, 0.5
        %v644 = vmul.f32 %v604, 0.5
        %v645 = vmul.f32 %v606, 0.5
        %v646 = vmul.f32 %v608, 0.5
        %v647 = vmul.f32 %v610, 0.5
        %v648 = vmul.f32 %v612, 0.5
        %v649 = vmul.f32 %v614, 0.5
        %v650 = vmul.f32 %v616, 0.5
        %v651 = vmul.f32 %v618, 0.5
        %v652 = vmul.f32 %v620, 0.5
        %v653 = vsub.f32 1.0, %v637
        %v654 = vsub.f32 1.0, %v638
        %v655 = vsub.f32 1.0, %v639
        %v656 = vsub.f32 1.0, %v640
        %v657 = vsub.f32 1.0, %v641
        %v658 = vsub.f32 1.0, %v642
        %v659 = vsub.f32 1.0, %v643
        %v660 = vsub.f32 1.0, %v644
        %v661 = vsub.f32 1.0, %v645
        %v662 = vsub.f32 1.0, %v646
        %v663 = vsub.f32 1.0, %v647
        %v664 = vsub.f32 1.0, %v648
        %v665 = vsub.f32 1.0, %v649
        %v666 = vsub.f32 1.0, %v650
        %v667 = vsub.f32 1.0, %v651
        %v668 = vsub.f32 1.0, %v652
        %v669 = vsel %vm621, %v637, %v653
        %v670 = vsel %vm622, %v638, %v654
        %v671 = vsel %vm623, %v639, %v655
        %v672 = vsel %vm624, %v640, %v656
        %v673 = vsel %vm625, %v641, %v657
        %v674 = vsel %vm626, %v642, %v658
        %v675 = vsel %vm627, %v643, %v659
        %v676 = vsel %vm628, %v644, %v660
        %v677 = vsel %vm629, %v645, %v661
        %v678 = vsel %vm630, %v646, %v662
        %v679 = vsel %vm631, %v647, %v663
        %v680 = vsel %vm632, %v648, %v664
        %v681 = vsel %vm633, %v649, %v665
        %v682 = vsel %vm634, %v650, %v666
        %v683 = vsel %vm635, %v651, %v667
        %v684 = vsel %vm636, %v652, %v668
        %v685 = vmul.f32 %v669, 10.0
        %v686 = vmul.f32 %v670, 10.0
        %v687 = vmul.f32 %v671, 10.0
        %v688 = vmul.f32 %v672, 10.0
        %v689 = vmul.f32 %v673, 10.0
        %v690 = vmul.f32 %v674, 10.0
        %v691 = vmul.f32 %v675, 10.0
        %v692 = vmul.f32 %v676, 10.0
        %v693 = vmul.f32 %v677, 10.0
        %v694 = vmul.f32 %v678, 10.0
        %v695 = vmul.f32 %v679, 10.0
        %v696 = vmul.f32 %v680, 10.0
        %v697 = vmul.f32 %v681, 10.0
        %v698 = vmul.f32 %v682, 10.0
        %v699 = vmul.f32 %v683, 10.0
        %v700 = vmul.f32 %v684, 10.0
        %v701 = vsub.f32 0.0, %v685
        %v702 = vsub.f32 0.0, %v686
        %v703 = vsub.f32 0.0, %v687
        %v704 = vsub.f32 0.0, %v688
        %v705 = vsub.f32 0.0, %v689
        %v706 = vsub.f32 0.0, %v690
        %v707 = vsub.f32 0.0, %v691
        %v708 = vsub.f32 0.0, %v692
        %v709 = vsub.f32 0.0, %v693
        %v710 = vsub.f32 0.0, %v694
        %v711 = vsub.f32 0.0, %v695
        %v712 = vsub.f32 0.0, %v696
        %v713 = vsub.f32 0.0, %v697
        %v714 = vsub.f32 0.0, %v698
        %v715 = vsub.f32 0.0, %v699
        %v716 = vsub.f32 0.0, %v700
        %v717 = vmul.f32 %v701, %v509
        %v718 = vmul.f32 %v702, %v510
        %v719 = vmul.f32 %v703, %v511
        %v720 = vmul.f32 %v704, %v512
        %v721 = vmul.f32 %v705, %v513
        %v722 = vmul.f32 %v706, %v514
        %v723 = vmul.f32 %v707, %v515
        %v724 = vmul.f32 %v708, %v516
        %v725 = vmul.f32 %v709, %v517
        %v726 = vmul.f32 %v710, %v518
        %v727 = vmul.f32 %v711, %v519
        %v728 = vmul.f32 %v712, %v520
        %v729 = vmul.f32 %v713, %v521
        %v730 = vmul.f32 %v714, %v522
        %v731 = vmul.f32 %v715, %v523
        %v732 = vmul.f32 %v716, %v524
        %v733 = vld [vmem:[#allocation2] sm:$0xff]
        %v734 = vld [vmem:[#allocation2 + $0x8] sm:$0xff]
        %v735 = vld [vmem:[#allocation2 + $0x10] sm:$0xff]
        %v736 = vld [vmem:[#allocation2 + $0x18] sm:$0xff]
        %v737 = vld [vmem:[#allocation2 + $0x20] sm:$0xff]
        %v738 = vld [vmem:[#allocation2 + $0x28] sm:$0xff]
        %v739 = vld [vmem:[#allocation2 + $0x30] sm:$0xff]
        %v740 = vld [vmem:[#allocation2 + $0x38] sm:$0xff]
        %v741 = vld [vmem:[#allocation2 + $0x40] sm:$0xff]
        %v742 = vld [vmem:[#allocation2 + $0x48] sm:$0xff]
        %v743 = vld [vmem:[#allocation2 + $0x50] sm:$0xff]
        %v744 = vld [vmem:[#allocation2 + $0x58] sm:$0xff]
        %v745 = vld [vmem:[#allocation2 + $0x60] sm:$0xff]
        %v746 = vld [vmem:[#allocation2 + $0x68] sm:$0xff]
        %v747 = vld [vmem:[#allocation2 + $0x70] sm:$0xff]
        %v748 = vld [vmem:[#allocation2 + $0x78] sm:$0xff]
        %v749 = vpack.c.bf16 %v718, %v717
        %v750 = vpack.c.bf16 %v720, %v719
        %v751 = vpack.c.bf16 %v722, %v721
        %v752 = vpack.c.bf16 %v724, %v723
        %v753 = vpack.c.bf16 %v726, %v725
        %v754 = vpack.c.bf16 %v728, %v727
        %v755 = vpack.c.bf16 %v730, %v729
        %v756 = vpack.c.bf16 %v732, %v731
        %v757 = vunpack.c.l.bf16 %v749
        %v758 = vunpack.c.h.bf16 %v749
        %v759 = vunpack.c.l.bf16 %v750
        %v760 = vunpack.c.h.bf16 %v750
        %v761 = vunpack.c.l.bf16 %v751
        %v762 = vunpack.c.h.bf16 %v751
        %v763 = vunpack.c.l.bf16 %v752
        %v764 = vunpack.c.h.bf16 %v752
        %v765 = vunpack.c.l.bf16 %v753
        %v766 = vunpack.c.h.bf16 %v753
        %v767 = vunpack.c.l.bf16 %v754
        %v768 = vunpack.c.h.bf16 %v754
        %v769 = vunpack.c.l.bf16 %v755
        %v770 = vunpack.c.h.bf16 %v755
        %v771 = vunpack.c.l.bf16 %v756
        %v772 = vunpack.c.h.bf16 %v756
        %v773 = vsub.f32 %v717, %v757
        %v774 = vsub.f32 %v718, %v758
        %v775 = vsub.f32 %v719, %v759
        %v776 = vsub.f32 %v720, %v760
        %v777 = vsub.f32 %v721, %v761
        %v778 = vsub.f32 %v722, %v762
        %v779 = vsub.f32 %v723, %v763
        %v780 = vsub.f32 %v724, %v764
        %v781 = vsub.f32 %v725, %v765
        %v782 = vsub.f32 %v726, %v766
        %v783 = vsub.f32 %v727, %v767
        %v784 = vsub.f32 %v728, %v768
        %v785 = vsub.f32 %v729, %v769
        %v786 = vsub.f32 %v730, %v770
        %v787 = vsub.f32 %v731, %v771
        %v788 = vsub.f32 %v732, %v772
        %789 = vmatprep.subr.mxu0 0.0
        %790 = vmatpush1.msra.mxu0 %v733
        %791 = vmatprep.subr.mxu0 0.0
        %792 = vmatpush1.msra.mxu0 %v734
        %793 = vmatprep.subr.mxu0 0.0
        %794 = vmatpush1.msra.mxu0 %v735
        %795 = vmatprep.subr.mxu0 0.0
        %796 = vmatpush1.msra.mxu0 %v736
        %797 = vmatprep.subr.mxu0 0.0
        %798 = vmatpush1.msra.mxu0 %v737
        %799 = vmatprep.subr.mxu0 0.0
        %800 = vmatpush1.msra.mxu0 %v738
        %801 = vmatprep.subr.mxu0 0.0
        %802 = vmatpush1.msra.mxu0 %v739
        %803 = vmatprep.subr.mxu0 0.0
        %804 = vmatpush1.msra.mxu0 %v740
        %805 = vmatprep.subr.mxu0 0.0
        %806 = vmatpush1.msra.mxu0 %v741
        %807 = vmatprep.subr.mxu0 0.0
        %808 = vmatpush1.msra.mxu0 %v742
        %809 = vmatprep.subr.mxu0 0.0
        %810 = vmatpush1.msra.mxu0 %v743
        %811 = vmatprep.subr.mxu0 0.0
        %812 = vmatpush1.msra.mxu0 %v744
        %813 = vmatprep.subr.mxu0 0.0
        %814 = vmatpush1.msra.mxu0 %v745
        %815 = vmatprep.subr.mxu0 0.0
        %816 = vmatpush1.msra.mxu0 %v746
        %817 = vmatprep.subr.mxu0 0.0
        %818 = vmatpush1.msra.mxu0 %v747
        %819 = vmatprep.subr.mxu0 0.0
        %820 = vmatpush1.msra.mxu0 %v748
        %821 = vmatprep.subr.mxu0 0.0
        %822 = vmatpush1.msra.mxu0 0.0
        %823 = vmatprep.subr.mxu0 0.0
        %824 = vmatpush1.msra.mxu0 0.0
        %825 = vmatprep.subr.mxu0 0.0
        %826 = vmatpush1.msra.mxu0 0.0
        %827 = vmatprep.subr.mxu0 0.0
        %828 = vmatpush1.msra.mxu0 0.0
        %829 = vmatprep.subr.mxu0 0.0
        %830 = vmatpush1.msra.mxu0 0.0
        %831 = vmatprep.subr.mxu0 0.0
        %832 = vmatpush1.msra.mxu0 0.0
        %833 = vmatprep.subr.mxu0 0.0
        %834 = vmatpush1.msra.mxu0 0.0
        %835 = vmatprep.subr.mxu0 0.0
        %836 = vmatpush1.msra.mxu0 0.0
        %837 = vmatprep.subr.mxu0 0.0
        %838 = vmatpush1.msra.mxu0 0.0
        %839 = vmatprep.subr.mxu0 0.0
        %840 = vmatpush1.msra.mxu0 0.0
        %841 = vmatprep.subr.mxu0 0.0
        %842 = vmatpush1.msra.mxu0 0.0
        %843 = vmatprep.subr.mxu0 0.0
        %844 = vmatpush1.msra.mxu0 0.0
        %845 = vmatprep.subr.mxu0 0.0
        %846 = vmatpush1.msra.mxu0 0.0
        %847 = vmatprep.subr.mxu0 0.0
        %848 = vmatpush1.msra.mxu0 0.0
        %849 = vmatprep.subr.mxu0 0.0
        %850 = vmatpush1.msra.mxu0 0.0
        %851 = vmatprep.subr.mxu0 0.0
        %852 = vmatpush1.msra.mxu0 0.0
        %853 = vmatprep.mubr.f32.mxu0 0.0
        %854 = vmatmul.mubr.f32.gmra.mrb[0].mxu0 %v773
        %v855 = vpop.f32.mrb[0].mxu0
        %v856 = vadd.f32 0.0, %v855
        %v857 = vpop.f32.mrb[0].mxu0
        %858 = vmatprep.mubr.f32.mxu0 0.0
        %859 = vmatmul.mubr.f32.gmra.mrb[0].mxu0 %v774
        %v860 = vpop.f32.mrb[0].mxu0
        %v861 = vadd.f32 0.0, %v860
        %v862 = vpop.f32.mrb[0].mxu0
        %863 = vmatprep.mubr.f32.mxu0 0.0
        %864 = vmatmul.mubr.f32.gmra.mrb[0].mxu0 %v775
        %v865 = vpop.f32.mrb[0].mxu0
        %v866 = vadd.f32 0.0, %v865
        %v867 = vpop.f32.mrb[0].mxu0
        %868 = vmatprep.mubr.f32.mxu0 0.0
        %869 = vmatmul.mubr.f32.gmra.mrb[0].mxu0 %v776
        %v870 = vpop.f32.mrb[0].mxu0
        %v871 = vadd.f32 0.0, %v870
        %v872 = vpop.f32.mrb[0].mxu0
        %873 = vmatprep.mubr.f32.mxu0 0.0
        %874 = vmatmul.mubr.f32.gmra.mrb[0].mxu0 %v777
        %v875 = vpop.f32.mrb[0].mxu0
        %v876 = vadd.f32 0.0, %v875
        %v877 = vpop.f32.mrb[0].mxu0
        %878 = vmatprep.mubr.f32.mxu0 0.0
        %879 = vmatmul.mubr.f32.gmra.mrb[0].mxu0 %v778
        %v880 = vpop.f32.mrb[0].mxu0
        %v881 = vadd.f32 0.0, %v880
        %v882 = vpop.f32.mrb[0].mxu0
        %883 = vmatprep.mubr.f32.mxu0 0.0
        %884 = vmatmul.mubr.f32.gmra.mrb[0].mxu0 %v779
        %v885 = vpop.f32.mrb[0].mxu0
        %v886 = vadd.f32 0.0, %v885
        %v887 = vpop.f32.mrb[0].mxu0
        %888 = vmatprep.mubr.f32.mxu0 0.0
        %889 = vmatmul.mubr.f32.gmra.mrb[0].mxu0 %v780
        %v890 = vpop.f32.mrb[0].mxu0
        %v891 = vadd.f32 0.0, %v890
        %v892 = vpop.f32.mrb[0].mxu0
        %893 = vmatprep.mubr.f32.mxu0 0.0
        %894 = vmatmul.mubr.f32.gmra.mrb[0].mxu0 %v781
        %v895 = vpop.f32.mrb[0].mxu0
        %v896 = vadd.f32 0.0, %v895
        %v897 = vpop.f32.mrb[0].mxu0
        %898 = vmatprep.mubr.f32.mxu0 0.0
        %899 = vmatmul.mubr.f32.gmra.mrb[0].mxu0 %v782
        %v900 = vpop.f32.mrb[0].mxu0
        %v901 = vadd.f32 0.0, %v900
        %v902 = vpop.f32.mrb[0].mxu0
        %903 = vmatprep.mubr.f32.mxu0 0.0
        %904 = vmatmul.mubr.f32.gmra.mrb[0].mxu0 %v783
        %v905 = vpop.f32.mrb[0].mxu0
        %v906 = vadd.f32 0.0, %v905
        %v907 = vpop.f32.mrb[0].mxu0
        %908 = vmatprep.mubr.f32.mxu0 0.0
        %909 = vmatmul.mubr.f32.gmra.mrb[0].mxu0 %v784
        %v910 = vpop.f32.mrb[0].mxu0
        %v911 = vadd.f32 0.0, %v910
        %v912 = vpop.f32.mrb[0].mxu0
        %913 = vmatprep.mubr.f32.mxu0 0.0
        %914 = vmatmul.mubr.f32.gmra.mrb[0].mxu0 %v785
        %v915 = vpop.f32.mrb[0].mxu0
        %v916 = vadd.f32 0.0, %v915
        %v917 = vpop.f32.mrb[0].mxu0
        %918 = vmatprep.mubr.f32.mxu0 0.0
        %919 = vmatmul.mubr.f32.gmra.mrb[0].mxu0 %v786
        %v920 = vpop.f32.mrb[0].mxu0
        %v921 = vadd.f32 0.0, %v920
        %v922 = vpop.f32.mrb[0].mxu0
        %923 = vmatprep.mubr.f32.mxu0 0.0
        %924 = vmatmul.mubr.f32.gmra.mrb[0].mxu0 %v787
        %v925 = vpop.f32.mrb[0].mxu0
        %v926 = vadd.f32 0.0, %v925
        %v927 = vpop.f32.mrb[0].mxu0
        %928 = vmatprep.mubr.f32.mxu0 0.0
        %929 = vmatmul.mubr.f32.gmra.mrb[0].mxu0 %v788
        %v930 = vpop.f32.mrb[0].mxu0
        %v931 = vadd.f32 0.0, %v930
        %v932 = vpop.f32.mrb[0].mxu0
        %933 = vdwg.mxu0
        %934 = vmatprep.subr.mxu0 0.0
        %935 = vmatpush1.msra.mxu0 %v733
        %936 = vmatprep.subr.mxu0 0.0
        %937 = vmatpush1.msra.mxu0 %v734
        %938 = vmatprep.subr.mxu0 0.0
        %939 = vmatpush1.msra.mxu0 %v735
        %940 = vmatprep.subr.mxu0 0.0
        %941 = vmatpush1.msra.mxu0 %v736
        %942 = vmatprep.subr.mxu0 0.0
        %943 = vmatpush1.msra.mxu0 %v737
        %944 = vmatprep.subr.mxu0 0.0
        %945 = vmatpush1.msra.mxu0 %v738
        %946 = vmatprep.subr.mxu0 0.0
        %947 = vmatpush1.msra.mxu0 %v739
        %948 = vmatprep.subr.mxu0 0.0
        %949 = vmatpush1.msra.mxu0 %v740
        %950 = vmatprep.subr.mxu0 0.0
        %951 = vmatpush1.msra.mxu0 %v741
        %952 = vmatprep.subr.mxu0 0.0
        %953 = vmatpush1.msra.mxu0 %v742
        %954 = vmatprep.subr.mxu0 0.0
        %955 = vmatpush1.msra.mxu0 %v743
        %956 = vmatprep.subr.mxu0 0.0
        %957 = vmatpush1.msra.mxu0 %v744
        %958 = vmatprep.subr.mxu0 0.0
        %959 = vmatpush1.msra.mxu0 %v745
        %960 = vmatprep.subr.mxu0 0.0
        %961 = vmatpush1.msra.mxu0 %v746
        %962 = vmatprep.subr.mxu0 0.0
        %963 = vmatpush1.msra.mxu0 %v747
        %964 = vmatprep.subr.mxu0 0.0
        %965 = vmatpush1.msra.mxu0 %v748
        %966 = vmatprep.subr.mxu0 0.0
        %967 = vmatpush1.msra.mxu0 0.0
        %968 = vmatprep.subr.mxu0 0.0
        %969 = vmatpush1.msra.mxu0 0.0
        %970 = vmatprep.subr.mxu0 0.0
        %971 = vmatpush1.msra.mxu0 0.0
        %972 = vmatprep.subr.mxu0 0.0
        %973 = vmatpush1.msra.mxu0 0.0
        %974 = vmatprep.subr.mxu0 0.0
        %975 = vmatpush1.msra.mxu0 0.0
        %976 = vmatprep.subr.mxu0 0.0
        %977 = vmatpush1.msra.mxu0 0.0
        %978 = vmatprep.subr.mxu0 0.0
        %979 = vmatpush1.msra.mxu0 0.0
        %980 = vmatprep.subr.mxu0 0.0
        %981 = vmatpush1.msra.mxu0 0.0
        %982 = vmatprep.subr.mxu0 0.0
        %983 = vmatpush1.msra.mxu0 0.0
        %984 = vmatprep.subr.mxu0 0.0
        %985 = vmatpush1.msra.mxu0 0.0
        %986 = vmatprep.subr.mxu0 0.0
        %987 = vmatpush1.msra.mxu0 0.0
        %988 = vmatprep.subr.mxu0 0.0
        %989 = vmatpush1.msra.mxu0 0.0
        %990 = vmatprep.subr.mxu0 0.0
        %991 = vmatpush1.msra.mxu0 0.0
        %992 = vmatprep.subr.mxu0 0.0
        %993 = vmatpush1.msra.mxu0 0.0
        %994 = vmatprep.subr.mxu0 0.0
        %995 = vmatpush1.msra.mxu0 0.0
        %996 = vmatprep.subr.mxu0 0.0
        %997 = vmatpush1.msra.mxu0 0.0
        %998 = vmatprep.mubr.f32.mxu0 0.0
        %999 = vmatmul.mubr.f32.gmra.mrb[0].mxu0 %v757
        %v1000 = vpop.f32.mrb[0].mxu0
        %v1001 = vadd.f32 %v856, %v1000
        %v1002 = vpop.f32.mrb[0].mxu0
        %1003 = vmatprep.mubr.f32.mxu0 0.0
        %1004 = vmatmul.mubr.f32.gmra.mrb[0].mxu0 %v758
        %v1005 = vpop.f32.mrb[0].mxu0
        %v1006 = vadd.f32 %v861, %v1005
        %v1007 = vpop.f32.mrb[0].mxu0
        %1008 = vmatprep.mubr.f32.mxu0 0.0
        %1009 = vmatmul.mubr.f32.gmra.mrb[0].mxu0 %v759
        %v1010 = vpop.f32.mrb[0].mxu0
        %v1011 = vadd.f32 %v866, %v1010
        %v1012 = vpop.f32.mrb[0].mxu0
        %1013 = vmatprep.mubr.f32.mxu0 0.0
        %1014 = vmatmul.mubr.f32.gmra.mrb[0].mxu0 %v760
        %v1015 = vpop.f32.mrb[0].mxu0
        %v1016 = vadd.f32 %v871, %v1015
        %v1017 = vpop.f32.mrb[0].mxu0
        %1018 = vmatprep.mubr.f32.mxu0 0.0
        %1019 = vmatmul.mubr.f32.gmra.mrb[0].mxu0 %v761
        %v1020 = vpop.f32.mrb[0].mxu0
        %v1021 = vadd.f32 %v876, %v1020
        %v1022 = vpop.f32.mrb[0].mxu0
        %1023 = vmatprep.mubr.f32.mxu0 0.0
        %1024 = vmatmul.mubr.f32.gmra.mrb[0].mxu0 %v762
        %v1025 = vpop.f32.mrb[0].mxu0
        %v1026 = vadd.f32 %v881, %v1025
        %v1027 = vpop.f32.mrb[0].mxu0
        %1028 = vmatprep.mubr.f32.mxu0 0.0
        %1029 = vmatmul.mubr.f32.gmra.mrb[0].mxu0 %v763
        %v1030 = vpop.f32.mrb[0].mxu0
        %v1031 = vadd.f32 %v886, %v1030
        %v1032 = vpop.f32.mrb[0].mxu0
        %1033 = vmatprep.mubr.f32.mxu0 0.0
        %1034 = vmatmul.mubr.f32.gmra.mrb[0].mxu0 %v764
        %v1035 = vpop.f32.mrb[0].mxu0
        %v1036 = vadd.f32 %v891, %v1035
        %v1037 = vpop.f32.mrb[0].mxu0
        %1038 = vmatprep.mubr.f32.mxu0 0.0
        %1039 = vmatmul.mubr.f32.gmra.mrb[0].mxu0 %v765
        %v1040 = vpop.f32.mrb[0].mxu0
        %v1041 = vadd.f32 %v896, %v1040
        %v1042 = vpop.f32.mrb[0].mxu0
        %1043 = vmatprep.mubr.f32.mxu0 0.0
        %1044 = vmatmul.mubr.f32.gmra.mrb[0].mxu0 %v766
        %v1045 = vpop.f32.mrb[0].mxu0
        %v1046 = vadd.f32 %v901, %v1045
        %v1047 = vpop.f32.mrb[0].mxu0
        %1048 = vmatprep.mubr.f32.mxu0 0.0
        %1049 = vmatmul.mubr.f32.gmra.mrb[0].mxu0 %v767
        %v1050 = vpop.f32.mrb[0].mxu0
        %v1051 = vadd.f32 %v906, %v1050
        %v1052 = vpop.f32.mrb[0].mxu0
        %1053 = vmatprep.mubr.f32.mxu0 0.0
        %1054 = vmatmul.mubr.f32.gmra.mrb[0].mxu0 %v768
        %v1055 = vpop.f32.mrb[0].mxu0
        %v1056 = vadd.f32 %v911, %v1055
        %v1057 = vpop.f32.mrb[0].mxu0
        %1058 = vmatprep.mubr.f32.mxu0 0.0
        %1059 = vmatmul.mubr.f32.gmra.mrb[0].mxu0 %v769
        %v1060 = vpop.f32.mrb[0].mxu0
        %v1061 = vadd.f32 %v916, %v1060
        %v1062 = vpop.f32.mrb[0].mxu0
        %1063 = vmatprep.mubr.f32.mxu0 0.0
        %1064 = vmatmul.mubr.f32.gmra.mrb[0].mxu0 %v770
        %v1065 = vpop.f32.mrb[0].mxu0
        %v1066 = vadd.f32 %v921, %v1065
        %v1067 = vpop.f32.mrb[0].mxu0
        %1068 = vmatprep.mubr.f32.mxu0 0.0
        %1069 = vmatmul.mubr.f32.gmra.mrb[0].mxu0 %v771
        %v1070 = vpop.f32.mrb[0].mxu0
        %v1071 = vadd.f32 %v926, %v1070
        %v1072 = vpop.f32.mrb[0].mxu0
        %1073 = vmatprep.mubr.f32.mxu0 0.0
        %1074 = vmatmul.mubr.f32.gmra.mrb[0].mxu0 %v772
        %v1075 = vpop.f32.mrb[0].mxu0
        %v1076 = vadd.f32 %v931, %v1075
        %v1077 = vpop.f32.mrb[0].mxu0
        %1078 = vdwg.mxu0
        %v1079 = vmul.f32 %v1001, 1.442695
        %v1080 = vpow.pop %v1079
        %v1081 = vmul.f32 %v1006, 1.442695
        %v1082 = vpow.pop %v1081
        %v1083 = vmul.f32 %v1011, 1.442695
        %v1084 = vpow.pop %v1083
        %v1085 = vmul.f32 %v1016, 1.442695
        %v1086 = vpow.pop %v1085
        %v1087 = vmul.f32 %v1021, 1.442695
        %v1088 = vpow.pop %v1087
        %v1089 = vmul.f32 %v1026, 1.442695
        %v1090 = vpow.pop %v1089
        %v1091 = vmul.f32 %v1031, 1.442695
        %v1092 = vpow.pop %v1091
        %v1093 = vmul.f32 %v1036, 1.442695
        %v1094 = vpow.pop %v1093
        %v1095 = vmul.f32 %v1041, 1.442695
        %v1096 = vpow.pop %v1095
        %v1097 = vmul.f32 %v1046, 1.442695
        %v1098 = vpow.pop %v1097
        %v1099 = vmul.f32 %v1051, 1.442695
        %v1100 = vpow.pop %v1099
        %v1101 = vmul.f32 %v1056, 1.442695
        %v1102 = vpow.pop %v1101
        %v1103 = vmul.f32 %v1061, 1.442695
        %v1104 = vpow.pop %v1103
        %v1105 = vmul.f32 %v1066, 1.442695
        %v1106 = vpow.pop %v1105
        %v1107 = vmul.f32 %v1071, 1.442695
        %v1108 = vpow.pop %v1107
        %v1109 = vmul.f32 %v1076, 1.442695
        %v1110 = vpow.pop %v1109
        %v1111 = vmul.f32 %v717, 1.442695
        %v1112 = vpow.pop %v1111
        %v1113 = vmul.f32 %v718, 1.442695
        %v1114 = vpow.pop %v1113
        %v1115 = vmul.f32 %v719, 1.442695
        %v1116 = vpow.pop %v1115
        %v1117 = vmul.f32 %v720, 1.442695
        %v1118 = vpow.pop %v1117
        %v1119 = vmul.f32 %v721, 1.442695
        %v1120 = vpow.pop %v1119
        %v1121 = vmul.f32 %v722, 1.442695
        %v1122 = vpow.pop %v1121
        %v1123 = vmul.f32 %v723, 1.442695
        %v1124 = vpow.pop %v1123
        %v1125 = vmul.f32 %v724, 1.442695
        %v1126 = vpow.pop %v1125
        %v1127 = vmul.f32 %v725, 1.442695
        %v1128 = vpow.pop %v1127
        %v1129 = vmul.f32 %v726, 1.442695
        %v1130 = vpow.pop %v1129
        %v1131 = vmul.f32 %v727, 1.442695
        %v1132 = vpow.pop %v1131
        %v1133 = vmul.f32 %v728, 1.442695
        %v1134 = vpow.pop %v1133
        %v1135 = vmul.f32 %v729, 1.442695
        %v1136 = vpow.pop %v1135
        %v1137 = vmul.f32 %v730, 1.442695
        %v1138 = vpow.pop %v1137
        %v1139 = vmul.f32 %v731, 1.442695
        %v1140 = vpow.pop %v1139
        %v1141 = vmul.f32 %v732, 1.442695
        %v1142 = vpow.pop %v1141
        %v1143 = vsub.f32 1.0, %v1112
        %v1144 = vsub.f32 1.0, %v1114
        %v1145 = vsub.f32 1.0, %v1116
        %v1146 = vsub.f32 1.0, %v1118
        %v1147 = vsub.f32 1.0, %v1120
        %v1148 = vsub.f32 1.0, %v1122
        %v1149 = vsub.f32 1.0, %v1124
        %v1150 = vsub.f32 1.0, %v1126
        %v1151 = vsub.f32 1.0, %v1128
        %v1152 = vsub.f32 1.0, %v1130
        %v1153 = vsub.f32 1.0, %v1132
        %v1154 = vsub.f32 1.0, %v1134
        %v1155 = vsub.f32 1.0, %v1136
        %v1156 = vsub.f32 1.0, %v1138
        %v1157 = vsub.f32 1.0, %v1140
        %v1158 = vsub.f32 1.0, %v1142
        %v1159 = vmul.f32 %v1080, %v1143
        %v1160 = vmul.f32 %v1082, %v1144
        %v1161 = vmul.f32 %v1084, %v1145
        %v1162 = vmul.f32 %v1086, %v1146
        %v1163 = vmul.f32 %v1088, %v1147
        %v1164 = vmul.f32 %v1090, %v1148
        %v1165 = vmul.f32 %v1092, %v1149
        %v1166 = vmul.f32 %v1094, %v1150
        %v1167 = vmul.f32 %v1096, %v1151
        %v1168 = vmul.f32 %v1098, %v1152
        %v1169 = vmul.f32 %v1100, %v1153
        %v1170 = vmul.f32 %v1102, %v1154
        %v1171 = vmul.f32 %v1104, %v1155
        %v1172 = vmul.f32 %v1106, %v1156
        %v1173 = vmul.f32 %v1108, %v1157
        %v1174 = vmul.f32 %v1110, %v1158
        %v1175 = vld [vmem:[#allocation4] sm:$0xff]
        %v1176 = vld [vmem:[#allocation4 + $0x8] sm:$0xff]
        %v1177 = vld [vmem:[#allocation4 + $0x10] sm:$0xff]
        %v1178 = vld [vmem:[#allocation4 + $0x18] sm:$0xff]
        %v1179 = vld [vmem:[#allocation4 + $0x20] sm:$0xff]
        %v1180 = vld [vmem:[#allocation4 + $0x28] sm:$0xff]
        %v1181 = vld [vmem:[#allocation4 + $0x30] sm:$0xff]
        %v1182 = vld [vmem:[#allocation4 + $0x38] sm:$0xff]
        %v1183 = vld [vmem:[#allocation4 + $0x40] sm:$0xff]
        %v1184 = vld [vmem:[#allocation4 + $0x48] sm:$0xff]
        %v1185 = vld [vmem:[#allocation4 + $0x50] sm:$0xff]
        %v1186 = vld [vmem:[#allocation4 + $0x58] sm:$0xff]
        %v1187 = vld [vmem:[#allocation4 + $0x60] sm:$0xff]
        %v1188 = vld [vmem:[#allocation4 + $0x68] sm:$0xff]
        %v1189 = vld [vmem:[#allocation4 + $0x70] sm:$0xff]
        %v1190 = vld [vmem:[#allocation4 + $0x78] sm:$0xff]
        %v1191 = vld [vmem:[#allocation4 + $0x80] sm:$0xff]
        %v1192 = vld [vmem:[#allocation4 + $0x88] sm:$0xff]
        %v1193 = vld [vmem:[#allocation4 + $0x90] sm:$0xff]
        %v1194 = vld [vmem:[#allocation4 + $0x98] sm:$0xff]
        %v1195 = vld [vmem:[#allocation4 + $0xa0] sm:$0xff]
        %v1196 = vld [vmem:[#allocation4 + $0xa8] sm:$0xff]
        %v1197 = vld [vmem:[#allocation4 + $0xb0] sm:$0xff]
        %v1198 = vld [vmem:[#allocation4 + $0xb8] sm:$0xff]
        %v1199 = vld [vmem:[#allocation4 + $0xc0] sm:$0xff]
        %v1200 = vld [vmem:[#allocation4 + $0xc8] sm:$0xff]
        %v1201 = vld [vmem:[#allocation4 + $0xd0] sm:$0xff]
        %v1202 = vld [vmem:[#allocation4 + $0xd8] sm:$0xff]
        %v1203 = vld [vmem:[#allocation4 + $0xe0] sm:$0xff]
        %v1204 = vld [vmem:[#allocation4 + $0xe8] sm:$0xff]
        %v1205 = vld [vmem:[#allocation4 + $0xf0] sm:$0xff]
        %v1206 = vld [vmem:[#allocation4 + $0xf8] sm:$0xff]
        %v1207 = vld [vmem:[#allocation4 + $0x100] sm:$0xff]
        %v1208 = vld [vmem:[#allocation4 + $0x108] sm:$0xff]
        %v1209 = vld [vmem:[#allocation4 + $0x110] sm:$0xff]
        %v1210 = vld [vmem:[#allocation4 + $0x118] sm:$0xff]
        %v1211 = vld [vmem:[#allocation4 + $0x120] sm:$0xff]
        %v1212 = vld [vmem:[#allocation4 + $0x128] sm:$0xff]
        %v1213 = vld [vmem:[#allocation4 + $0x130] sm:$0xff]
        %v1214 = vld [vmem:[#allocation4 + $0x138] sm:$0xff]
        %v1215 = vld [vmem:[#allocation4 + $0x140] sm:$0xff]
        %v1216 = vld [vmem:[#allocation4 + $0x148] sm:$0xff]
        %v1217 = vld [vmem:[#allocation4 + $0x150] sm:$0xff]
        %v1218 = vld [vmem:[#allocation4 + $0x158] sm:$0xff]
        %v1219 = vld [vmem:[#allocation4 + $0x160] sm:$0xff]
        %v1220 = vld [vmem:[#allocation4 + $0x168] sm:$0xff]
        %v1221 = vld [vmem:[#allocation4 + $0x170] sm:$0xff]
        %v1222 = vld [vmem:[#allocation4 + $0x178] sm:$0xff]
        %v1223 = vpack.c.bf16 %v1160, %v1159
        %v1224 = vpack.c.bf16 %v1162, %v1161
        %v1225 = vpack.c.bf16 %v1164, %v1163
        %v1226 = vpack.c.bf16 %v1166, %v1165
        %v1227 = vpack.c.bf16 %v1168, %v1167
        %v1228 = vpack.c.bf16 %v1170, %v1169
        %v1229 = vpack.c.bf16 %v1172, %v1171
        %v1230 = vpack.c.bf16 %v1174, %v1173
        %v1231 = vunpack.c.l.bf16 %v1223
        %v1232 = vunpack.c.h.bf16 %v1223
        %v1233 = vunpack.c.l.bf16 %v1224
        %v1234 = vunpack.c.h.bf16 %v1224
        %v1235 = vunpack.c.l.bf16 %v1225
        %v1236 = vunpack.c.h.bf16 %v1225
        %v1237 = vunpack.c.l.bf16 %v1226
        %v1238 = vunpack.c.h.bf16 %v1226
        %v1239 = vunpack.c.l.bf16 %v1227
        %v1240 = vunpack.c.h.bf16 %v1227
        %v1241 = vunpack.c.l.bf16 %v1228
        %v1242 = vunpack.c.h.bf16 %v1228
        %v1243 = vunpack.c.l.bf16 %v1229
        %v1244 = vunpack.c.h.bf16 %v1229
        %v1245 = vunpack.c.l.bf16 %v1230
        %v1246 = vunpack.c.h.bf16 %v1230
        %v1247 = vsub.f32 %v1159, %v1231
        %v1248 = vsub.f32 %v1160, %v1232
        %v1249 = vsub.f32 %v1161, %v1233
        %v1250 = vsub.f32 %v1162, %v1234
        %v1251 = vsub.f32 %v1163, %v1235
        %v1252 = vsub.f32 %v1164, %v1236
        %v1253 = vsub.f32 %v1165, %v1237
        %v1254 = vsub.f32 %v1166, %v1238
        %v1255 = vsub.f32 %v1167, %v1239
        %v1256 = vsub.f32 %v1168, %v1240
        %v1257 = vsub.f32 %v1169, %v1241
        %v1258 = vsub.f32 %v1170, %v1242
        %v1259 = vsub.f32 %v1171, %v1243
        %v1260 = vsub.f32 %v1172, %v1244
        %v1261 = vsub.f32 %v1173, %v1245
        %v1262 = vsub.f32 %v1174, %v1246
        %1263 = vmatprep.subr.mxu0 %v1176
        %1264 = vmatpush1.msra.mxu0 %v1175
        %1265 = vmatprep.subr.mxu0 %v1179
        %1266 = vmatpush1.msra.mxu0 %v1178
        %1267 = vmatprep.subr.mxu0 %v1182
        %1268 = vmatpush1.msra.mxu0 %v1181
        %1269 = vmatprep.subr.mxu0 %v1185
        %1270 = vmatpush1.msra.mxu0 %v1184
        %1271 = vmatprep.subr.mxu0 %v1188
        %1272 = vmatpush1.msra.mxu0 %v1187
        %1273 = vmatprep.subr.mxu0 %v1191
        %1274 = vmatpush1.msra.mxu0 %v1190
        %1275 = vmatprep.subr.mxu0 %v1194
        %1276 = vmatpush1.msra.mxu0 %v1193
        %1277 = vmatprep.subr.mxu0 %v1197
        %1278 = vmatpush1.msra.mxu0 %v1196
        %1279 = vmatprep.subr.mxu0 %v1200
        %1280 = vmatpush1.msra.mxu0 %v1199
        %1281 = vmatprep.subr.mxu0 %v1203
        %1282 = vmatpush1.msra.mxu0 %v1202
        %1283 = vmatprep.subr.mxu0 %v1206
        %1284 = vmatpush1.msra.mxu0 %v1205
        %1285 = vmatprep.subr.mxu0 %v1209
        %1286 = vmatpush1.msra.mxu0 %v1208
        %1287 = vmatprep.subr.mxu0 %v1212
        %1288 = vmatpush1.msra.mxu0 %v1211
        %1289 = vmatprep.subr.mxu0 %v1215
        %1290 = vmatpush1.msra.mxu0 %v1214
        %1291 = vmatprep.subr.mxu0 %v1218
        %1292 = vmatpush1.msra.mxu0 %v1217
        %1293 = vmatprep.subr.mxu0 %v1221
        %1294 = vmatpush1.msra.mxu0 %v1220
        %1295 = vmatprep.subr.mxu0 0.0
        %1296 = vmatpush1.msra.mxu0 0.0
        %1297 = vmatprep.subr.mxu0 0.0
        %1298 = vmatpush1.msra.mxu0 0.0
        %1299 = vmatprep.subr.mxu0 0.0
        %1300 = vmatpush1.msra.mxu0 0.0
        %1301 = vmatprep.subr.mxu0 0.0
        %1302 = vmatpush1.msra.mxu0 0.0
        %1303 = vmatprep.subr.mxu0 0.0
        %1304 = vmatpush1.msra.mxu0 0.0
        %1305 = vmatprep.subr.mxu0 0.0
        %1306 = vmatpush1.msra.mxu0 0.0
        %1307 = vmatprep.subr.mxu0 0.0
        %1308 = vmatpush1.msra.mxu0 0.0
        %1309 = vmatprep.subr.mxu0 0.0
        %1310 = vmatpush1.msra.mxu0 0.0
        %1311 = vmatprep.subr.mxu0 0.0
        %1312 = vmatpush1.msra.mxu0 0.0
        %1313 = vmatprep.subr.mxu0 0.0
        %1314 = vmatpush1.msra.mxu0 0.0
        %1315 = vmatprep.subr.mxu0 0.0
        %1316 = vmatpush1.msra.mxu0 0.0
        %1317 = vmatprep.subr.mxu0 0.0
        %1318 = vmatpush1.msra.mxu0 0.0
        %1319 = vmatprep.subr.mxu0 0.0
        %1320 = vmatpush1.msra.mxu0 0.0
        %1321 = vmatprep.subr.mxu0 0.0
        %1322 = vmatpush1.msra.mxu0 0.0
        %1323 = vmatprep.subr.mxu0 0.0
        %1324 = vmatpush1.msra.mxu0 0.0
        %1325 = vmatprep.subr.mxu0 0.0
        %1326 = vmatpush1.msra.mxu0 0.0
        %1327 = vmatprep.mubr.f32.mxu0 0.0
        %1328 = vmatmul.mubr.f32.gmra.mrb[0].mxu0 %v1247
        %v1329 = vpop.f32.mrb[0].mxu0
        %v1330 = vadd.f32 0.0, %v1329
        %v1331 = vpop.f32.mrb[0].mxu0
        %v1332 = vadd.f32 0.0, %v1331
        %1333 = vmatprep.mubr.f32.mxu0 0.0
        %1334 = vmatmul.mubr.f32.gmra.mrb[0].mxu0 %v1248
        %v1335 = vpop.f32.mrb[0].mxu0
        %v1336 = vadd.f32 0.0, %v1335
        %v1337 = vpop.f32.mrb[0].mxu0
        %v1338 = vadd.f32 0.0, %v1337
        %1339 = vmatprep.mubr.f32.mxu0 0.0
        %1340 = vmatmul.mubr.f32.gmra.mrb[0].mxu0 %v1249
        %v1341 = vpop.f32.mrb[0].mxu0
        %v1342 = vadd.f32 0.0, %v1341
        %v1343 = vpop.f32.mrb[0].mxu0
        %v1344 = vadd.f32 0.0, %v1343
        %1345 = vmatprep.mubr.f32.mxu0 0.0
        %1346 = vmatmul.mubr.f32.gmra.mrb[0].mxu0 %v1250
        %v1347 = vpop.f32.mrb[0].mxu0
        %v1348 = vadd.f32 0.0, %v1347
        %v1349 = vpop.f32.mrb[0].mxu0
        %v1350 = vadd.f32 0.0, %v1349
        %1351 = vmatprep.mubr.f32.mxu0 0.0
        %1352 = vmatmul.mubr.f32.gmra.mrb[0].mxu0 %v1251
        %v1353 = vpop.f32.mrb[0].mxu0
        %v1354 = vadd.f32 0.0, %v1353
        %v1355 = vpop.f32.mrb[0].mxu0
        %v1356 = vadd.f32 0.0, %v1355
        %1357 = vmatprep.mubr.f32.mxu0 0.0
        %1358 = vmatmul.mubr.f32.gmra.mrb[0].mxu0 %v1252
        %v1359 = vpop.f32.mrb[0].mxu0
        %v1360 = vadd.f32 0.0, %v1359
        %v1361 = vpop.f32.mrb[0].mxu0
        %v1362 = vadd.f32 0.0, %v1361
        %1363 = vmatprep.mubr.f32.mxu0 0.0
        %1364 = vmatmul.mubr.f32.gmra.mrb[0].mxu0 %v1253
        %v1365 = vpop.f32.mrb[0].mxu0
        %v1366 = vadd.f32 0.0, %v1365
        %v1367 = vpop.f32.mrb[0].mxu0
        %v1368 = vadd.f32 0.0, %v1367
        %1369 = vmatprep.mubr.f32.mxu0 0.0
        %1370 = vmatmul.mubr.f32.gmra.mrb[0].mxu0 %v1254
        %v1371 = vpop.f32.mrb[0].mxu0
        %v1372 = vadd.f32 0.0, %v1371
        %v1373 = vpop.f32.mrb[0].mxu0
        %v1374 = vadd.f32 0.0, %v1373
        %1375 = vmatprep.mubr.f32.mxu0 0.0
        %1376 = vmatmul.mubr.f32.gmra.mrb[0].mxu0 %v1255
        %v1377 = vpop.f32.mrb[0].mxu0
        %v1378 = vadd.f32 0.0, %v1377
        %v1379 = vpop.f32.mrb[0].mxu0
        %v1380 = vadd.f32 0.0, %v1379
        %1381 = vmatprep.mubr.f32.mxu0 0.0
        %1382 = vmatmul.mubr.f32.gmra.mrb[0].mxu0 %v1256
        %v1383 = vpop.f32.mrb[0].mxu0
        %v1384 = vadd.f32 0.0, %v1383
        %v1385 = vpop.f32.mrb[0].mxu0
        %v1386 = vadd.f32 0.0, %v1385
        %1387 = vmatprep.mubr.f32.mxu0 0.0
        %1388 = vmatmul.mubr.f32.gmra.mrb[0].mxu0 %v1257
        %v1389 = vpop.f32.mrb[0].mxu0
        %v1390 = vadd.f32 0.0, %v1389
        %v1391 = vpop.f32.mrb[0].mxu0
        %v1392 = vadd.f32 0.0, %v1391
        %1393 = vmatprep.mubr.f32.mxu0 0.0
        %1394 = vmatmul.mubr.f32.gmra.mrb[0].mxu0 %v1258
        %v1395 = vpop.f32.mrb[0].mxu0
        %v1396 = vadd.f32 0.0, %v1395
        %v1397 = vpop.f32.mrb[0].mxu0
        %v1398 = vadd.f32 0.0, %v1397
        %1399 = vmatprep.mubr.f32.mxu0 0.0
        %1400 = vmatmul.mubr.f32.gmra.mrb[0].mxu0 %v1259
        %v1401 = vpop.f32.mrb[0].mxu0
        %v1402 = vadd.f32 0.0, %v1401
        %v1403 = vpop.f32.mrb[0].mxu0
        %v1404 = vadd.f32 0.0, %v1403
        %1405 = vmatprep.mubr.f32.mxu0 0.0
        %1406 = vmatmul.mubr.f32.gmra.mrb[0].mxu0 %v1260
        %v1407 = vpop.f32.mrb[0].mxu0
        %v1408 = vadd.f32 0.0, %v1407
        %v1409 = vpop.f32.mrb[0].mxu0
        %v1410 = vadd.f32 0.0, %v1409
        %1411 = vmatprep.mubr.f32.mxu0 0.0
        %1412 = vmatmul.mubr.f32.gmra.mrb[0].mxu0 %v1261
        %v1413 = vpop.f32.mrb[0].mxu0
        %v1414 = vadd.f32 0.0, %v1413
        %v1415 = vpop.f32.mrb[0].mxu0
        %v1416 = vadd.f32 0.0, %v1415
        %1417 = vmatprep.mubr.f32.mxu0 0.0
        %1418 = vmatmul.mubr.f32.gmra.mrb[0].mxu0 %v1262
        %v1419 = vpop.f32.mrb[0].mxu0
        %v1420 = vadd.f32 0.0, %v1419
        %v1421 = vpop.f32.mrb[0].mxu0
        %v1422 = vadd.f32 0.0, %v1421
        %1423 = vdwg.mxu0
        %1424 = vmatprep.subr.mxu0 0.0
        %1425 = vmatpush1.msra.mxu0 %v1177
        %1426 = vmatprep.subr.mxu0 0.0
        %1427 = vmatpush1.msra.mxu0 %v1180
        %1428 = vmatprep.subr.mxu0 0.0
        %1429 = vmatpush1.msra.mxu0 %v1183
        %1430 = vmatprep.subr.mxu0 0.0
        %1431 = vmatpush1.msra.mxu0 %v1186
        %1432 = vmatprep.subr.mxu0 0.0
        %1433 = vmatpush1.msra.mxu0 %v1189
        %1434 = vmatprep.subr.mxu0 0.0
        %1435 = vmatpush1.msra.mxu0 %v1192
        %1436 = vmatprep.subr.mxu0 0.0
        %1437 = vmatpush1.msra.mxu0 %v1195
        %1438 = vmatprep.subr.mxu0 0.0
        %1439 = vmatpush1.msra.mxu0 %v1198
        %1440 = vmatprep.subr.mxu0 0.0
        %1441 = vmatpush1.msra.mxu0 %v1201
        %1442 = vmatprep.subr.mxu0 0.0
        %1443 = vmatpush1.msra.mxu0 %v1204
        %1444 = vmatprep.subr.mxu0 0.0
        %1445 = vmatpush1.msra.mxu0 %v1207
        %1446 = vmatprep.subr.mxu0 0.0
        %1447 = vmatpush1.msra.mxu0 %v1210
        %1448 = vmatprep.subr.mxu0 0.0
        %1449 = vmatpush1.msra.mxu0 %v1213
        %1450 = vmatprep.subr.mxu0 0.0
        %1451 = vmatpush1.msra.mxu0 %v1216
        %1452 = vmatprep.subr.mxu0 0.0
        %1453 = vmatpush1.msra.mxu0 %v1219
        %1454 = vmatprep.subr.mxu0 0.0
        %1455 = vmatpush1.msra.mxu0 %v1222
        %1456 = vmatprep.subr.mxu0 0.0
        %1457 = vmatpush1.msra.mxu0 0.0
        %1458 = vmatprep.subr.mxu0 0.0
        %1459 = vmatpush1.msra.mxu0 0.0
        %1460 = vmatprep.subr.mxu0 0.0
        %1461 = vmatpush1.msra.mxu0 0.0
        %1462 = vmatprep.subr.mxu0 0.0
        %1463 = vmatpush1.msra.mxu0 0.0
        %1464 = vmatprep.subr.mxu0 0.0
        %1465 = vmatpush1.msra.mxu0 0.0
        %1466 = vmatprep.subr.mxu0 0.0
        %1467 = vmatpush1.msra.mxu0 0.0
        %1468 = vmatprep.subr.mxu0 0.0
        %1469 = vmatpush1.msra.mxu0 0.0
        %1470 = vmatprep.subr.mxu0 0.0
        %1471 = vmatpush1.msra.mxu0 0.0
        %1472 = vmatprep.subr.mxu0 0.0
        %1473 = vmatpush1.msra.mxu0 0.0
        %1474 = vmatprep.subr.mxu0 0.0
        %1475 = vmatpush1.msra.mxu0 0.0
        %1476 = vmatprep.subr.mxu0 0.0
        %1477 = vmatpush1.msra.mxu0 0.0
        %1478 = vmatprep.subr.mxu0 0.0
        %1479 = vmatpush1.msra.mxu0 0.0
        %1480 = vmatprep.subr.mxu0 0.0
        %1481 = vmatpush1.msra.mxu0 0.0
        %1482 = vmatprep.subr.mxu0 0.0
        %1483 = vmatpush1.msra.mxu0 0.0
        %1484 = vmatprep.subr.mxu0 0.0
        %1485 = vmatpush1.msra.mxu0 0.0
        %1486 = vmatprep.subr.mxu0 0.0
        %1487 = vmatpush1.msra.mxu0 0.0
        %1488 = vmatprep.mubr.f32.mxu0 0.0
        %1489 = vmatmul.mubr.f32.gmra.mrb[0].mxu0 %v1247
        %v1490 = vpop.f32.mrb[0].mxu0
        %v1491 = vadd.f32 0.0, %v1490
        %v1492 = vpop.f32.mrb[0].mxu0
        %1493 = vmatprep.mubr.f32.mxu0 0.0
        %1494 = vmatmul.mubr.f32.gmra.mrb[0].mxu0 %v1248
        %v1495 = vpop.f32.mrb[0].mxu0
        %v1496 = vadd.f32 0.0, %v1495
        %v1497 = vpop.f32.mrb[0].mxu0
        %1498 = vmatprep.mubr.f32.mxu0 0.0
        %1499 = vmatmul.mubr.f32.gmra.mrb[0].mxu0 %v1249
        %v1500 = vpop.f32.mrb[0].mxu0
        %v1501 = vadd.f32 0.0, %v1500
        %v1502 = vpop.f32.mrb[0].mxu0
        %1503 = vmatprep.mubr.f32.mxu0 0.0
        %1504 = vmatmul.mubr.f32.gmra.mrb[0].mxu0 %v1250
        %v1505 = vpop.f32.mrb[0].mxu0
        %v1506 = vadd.f32 0.0, %v1505
        %v1507 = vpop.f32.mrb[0].mxu0
        %1508 = vmatprep.mubr.f32.mxu0 0.0
        %1509 = vmatmul.mubr.f32.gmra.mrb[0].mxu0 %v1251
        %v1510 = vpop.f32.mrb[0].mxu0
        %v1511 = vadd.f32 0.0, %v1510
        %v1512 = vpop.f32.mrb[0].mxu0
        %1513 = vmatprep.mubr.f32.mxu0 0.0
        %1514 = vmatmul.mubr.f32.gmra.mrb[0].mxu0 %v1252
        %v1515 = vpop.f32.mrb[0].mxu0
        %v1516 = vadd.f32 0.0, %v1515
        %v1517 = vpop.f32.mrb[0].mxu0
        %1518 = vmatprep.mubr.f32.mxu0 0.0
        %1519 = vmatmul.mubr.f32.gmra.mrb[0].mxu0 %v1253
        %v1520 = vpop.f32.mrb[0].mxu0
        %v1521 = vadd.f32 0.0, %v1520
        %v1522 = vpop.f32.mrb[0].mxu0
        %1523 = vmatprep.mubr.f32.mxu0 0.0
        %1524 = vmatmul.mubr.f32.gmra.mrb[0].mxu0 %v1254
        %v1525 = vpop.f32.mrb[0].mxu0
        %v1526 = vadd.f32 0.0, %v1525
        %v1527 = vpop.f32.mrb[0].mxu0
        %1528 = vmatprep.mubr.f32.mxu0 0.0
        %1529 = vmatmul.mubr.f32.gmra.mrb[0].mxu0 %v1255
        %v1530 = vpop.f32.mrb[0].mxu0
        %v1531 = vadd.f32 0.0, %v1530
        %v1532 = vpop.f32.mrb[0].mxu0
        %1533 = vmatprep.mubr.f32.mxu0 0.0
        %1534 = vmatmul.mubr.f32.gmra.mrb[0].mxu0 %v1256
        %v1535 = vpop.f32.mrb[0].mxu0
        %v1536 = vadd.f32 0.0, %v1535
        %v1537 = vpop.f32.mrb[0].mxu0
        %1538 = vmatprep.mubr.f32.mxu0 0.0
        %1539 = vmatmul.mubr.f32.gmra.mrb[0].mxu0 %v1257
        %v1540 = vpop.f32.mrb[0].mxu0
        %v1541 = vadd.f32 0.0, %v1540
        %v1542 = vpop.f32.mrb[0].mxu0
        %1543 = vmatprep.mubr.f32.mxu0 0.0
        %1544 = vmatmul.mubr.f32.gmra.mrb[0].mxu0 %v1258
        %v1545 = vpop.f32.mrb[0].mxu0
        %v1546 = vadd.f32 0.0, %v1545
        %v1547 = vpop.f32.mrb[0].mxu0
        %1548 = vmatprep.mubr.f32.mxu0 0.0
        %1549 = vmatmul.mubr.f32.gmra.mrb[0].mxu0 %v1259
        %v1550 = vpop.f32.mrb[0].mxu0
        %v1551 = vadd.f32 0.0, %v1550
        %v1552 = vpop.f32.mrb[0].mxu0
        %1553 = vmatprep.mubr.f32.mxu0 0.0
        %1554 = vmatmul.mubr.f32.gmra.mrb[0].mxu0 %v1260
        %v1555 = vpop.f32.mrb[0].mxu0
        %v1556 = vadd.f32 0.0, %v1555
        %v1557 = vpop.f32.mrb[0].mxu0
        %1558 = vmatprep.mubr.f32.mxu0 0.0
        %1559 = vmatmul.mubr.f32.gmra.mrb[0].mxu0 %v1261
        %v1560 = vpop.f32.mrb[0].mxu0
        %v1561 = vadd.f32 0.0, %v1560
        %v1562 = vpop.f32.mrb[0].mxu0
        %1563 = vmatprep.mubr.f32.mxu0 0.0
        %1564 = vmatmul.mubr.f32.gmra.mrb[0].mxu0 %v1262
        %v1565 = vpop.f32.mrb[0].mxu0
        %v1566 = vadd.f32 0.0, %v1565
        %v1567 = vpop.f32.mrb[0].mxu0
        %1568 = vdwg.mxu0
        %1569 = vmatprep.subr.mxu0 %v1176
        %1570 = vmatpush1.msra.mxu0 %v1175
        %1571 = vmatprep.subr.mxu0 %v1179
        %1572 = vmatpush1.msra.mxu0 %v1178
        %1573 = vmatprep.subr.mxu0 %v1182
        %1574 = vmatpush1.msra.mxu0 %v1181
        %1575 = vmatprep.subr.mxu0 %v1185
        %1576 = vmatpush1.msra.mxu0 %v1184
        %1577 = vmatprep.subr.mxu0 %v1188
        %1578 = vmatpush1.msra.mxu0 %v1187
        %1579 = vmatprep.subr.mxu0 %v1191
        %1580 = vmatpush1.msra.mxu0 %v1190
        %1581 = vmatprep.subr.mxu0 %v1194
        %1582 = vmatpush1.msra.mxu0 %v1193
        %1583 = vmatprep.subr.mxu0 %v1197
        %1584 = vmatpush1.msra.mxu0 %v1196
        %1585 = vmatprep.subr.mxu0 %v1200
        %1586 = vmatpush1.msra.mxu0 %v1199
        %1587 = vmatprep.subr.mxu0 %v1203
        %1588 = vmatpush1.msra.mxu0 %v1202
        %1589 = vmatprep.subr.mxu0 %v1206
        %1590 = vmatpush1.msra.mxu0 %v1205
        %1591 = vmatprep.subr.mxu0 %v1209
        %1592 = vmatpush1.msra.mxu0 %v1208
        %1593 = vmatprep.subr.mxu0 %v1212
        %1594 = vmatpush1.msra.mxu0 %v1211
        %1595 = vmatprep.subr.mxu0 %v1215
        %1596 = vmatpush1.msra.mxu0 %v1214
        %1597 = vmatprep.subr.mxu0 %v1218
        %1598 = vmatpush1.msra.mxu0 %v1217
        %1599 = vmatprep.subr.mxu0 %v1221
        %1600 = vmatpush1.msra.mxu0 %v1220
        %1601 = vmatprep.subr.mxu0 0.0
        %1602 = vmatpush1.msra.mxu0 0.0
        %1603 = vmatprep.subr.mxu0 0.0
        %1604 = vmatpush1.msra.mxu0 0.0
        %1605 = vmatprep.subr.mxu0 0.0
        %1606 = vmatpush1.msra.mxu0 0.0
        %1607 = vmatprep.subr.mxu0 0.0
        %1608 = vmatpush1.msra.mxu0 0.0
        %1609 = vmatprep.subr.mxu0 0.0
        %1610 = vmatpush1.msra.mxu0 0.0
        %1611 = vmatprep.subr.mxu0 0.0
        %1612 = vmatpush1.msra.mxu0 0.0
        %1613 = vmatprep.subr.mxu0 0.0
        %1614 = vmatpush1.msra.mxu0 0.0
        %1615 = vmatprep.subr.mxu0 0.0
        %1616 = vmatpush1.msra.mxu0 0.0
        %1617 = vmatprep.subr.mxu0 0.0
        %1618 = vmatpush1.msra.mxu0 0.0
        %1619 = vmatprep.subr.mxu0 0.0
        %1620 = vmatpush1.msra.mxu0 0.0
        %1621 = vmatprep.subr.mxu0 0.0
        %1622 = vmatpush1.msra.mxu0 0.0
        %1623 = vmatprep.subr.mxu0 0.0
        %1624 = vmatpush1.msra.mxu0 0.0
        %1625 = vmatprep.subr.mxu0 0.0
        %1626 = vmatpush1.msra.mxu0 0.0
        %1627 = vmatprep.subr.mxu0 0.0
        %1628 = vmatpush1.msra.mxu0 0.0
        %1629 = vmatprep.subr.mxu0 0.0
        %1630 = vmatpush1.msra.mxu0 0.0
        %1631 = vmatprep.subr.mxu0 0.0
        %1632 = vmatpush1.msra.mxu0 0.0
        %1633 = vmatprep.mubr.f32.mxu0 0.0
        %1634 = vmatmul.mubr.f32.gmra.mrb[0].mxu0 %v1231
        %v1635 = vpop.f32.mrb[0].mxu0
        %v1636 = vadd.f32 %v1330, %v1635
        %v1637 = vpop.f32.mrb[0].mxu0
        %v1638 = vadd.f32 %v1332, %v1637
        %1639 = vmatprep.mubr.f32.mxu0 0.0
        %1640 = vmatmul.mubr.f32.gmra.mrb[0].mxu0 %v1232
        %v1641 = vpop.f32.mrb[0].mxu0
        %v1642 = vadd.f32 %v1336, %v1641
        %v1643 = vpop.f32.mrb[0].mxu0
        %v1644 = vadd.f32 %v1338, %v1643
        %1645 = vmatprep.mubr.f32.mxu0 0.0
        %1646 = vmatmul.mubr.f32.gmra.mrb[0].mxu0 %v1233
        %v1647 = vpop.f32.mrb[0].mxu0
        %v1648 = vadd.f32 %v1342, %v1647
        %v1649 = vpop.f32.mrb[0].mxu0
        %v1650 = vadd.f32 %v1344, %v1649
        %1651 = vmatprep.mubr.f32.mxu0 0.0
        %1652 = vmatmul.mubr.f32.gmra.mrb[0].mxu0 %v1234
        %v1653 = vpop.f32.mrb[0].mxu0
        %v1654 = vadd.f32 %v1348, %v1653
        %v1655 = vpop.f32.mrb[0].mxu0
        %v1656 = vadd.f32 %v1350, %v1655
        %1657 = vmatprep.mubr.f32.mxu0 0.0
        %1658 = vmatmul.mubr.f32.gmra.mrb[0].mxu0 %v1235
        %v1659 = vpop.f32.mrb[0].mxu0
        %v1660 = vadd.f32 %v1354, %v1659
        %v1661 = vpop.f32.mrb[0].mxu0
        %v1662 = vadd.f32 %v1356, %v1661
        %1663 = vmatprep.mubr.f32.mxu0 0.0
        %1664 = vmatmul.mubr.f32.gmra.mrb[0].mxu0 %v1236
        %v1665 = vpop.f32.mrb[0].mxu0
        %v1666 = vadd.f32 %v1360, %v1665
        %v1667 = vpop.f32.mrb[0].mxu0
        %v1668 = vadd.f32 %v1362, %v1667
        %1669 = vmatprep.mubr.f32.mxu0 0.0
        %1670 = vmatmul.mubr.f32.gmra.mrb[0].mxu0 %v1237
        %v1671 = vpop.f32.mrb[0].mxu0
        %v1672 = vadd.f32 %v1366, %v1671
        %v1673 = vpop.f32.mrb[0].mxu0
        %v1674 = vadd.f32 %v1368, %v1673
        %1675 = vmatprep.mubr.f32.mxu0 0.0
        %1676 = vmatmul.mubr.f32.gmra.mrb[0].mxu0 %v1238
        %v1677 = vpop.f32.mrb[0].mxu0
        %v1678 = vadd.f32 %v1372, %v1677
        %v1679 = vpop.f32.mrb[0].mxu0
        %v1680 = vadd.f32 %v1374, %v1679
        %1681 = vmatprep.mubr.f32.mxu0 0.0
        %1682 = vmatmul.mubr.f32.gmra.mrb[0].mxu0 %v1239
        %v1683 = vpop.f32.mrb[0].mxu0
        %v1684 = vadd.f32 %v1378, %v1683
        %v1685 = vpop.f32.mrb[0].mxu0
        %v1686 = vadd.f32 %v1380, %v1685
        %1687 = vmatprep.mubr.f32.mxu0 0.0
        %1688 = vmatmul.mubr.f32.gmra.mrb[0].mxu0 %v1240
        %v1689 = vpop.f32.mrb[0].mxu0
        %v1690 = vadd.f32 %v1384, %v1689
        %v1691 = vpop.f32.mrb[0].mxu0
        %v1692 = vadd.f32 %v1386, %v1691
        %1693 = vmatprep.mubr.f32.mxu0 0.0
        %1694 = vmatmul.mubr.f32.gmra.mrb[0].mxu0 %v1241
        %v1695 = vpop.f32.mrb[0].mxu0
        %v1696 = vadd.f32 %v1390, %v1695
        %v1697 = vpop.f32.mrb[0].mxu0
        %v1698 = vadd.f32 %v1392, %v1697
        %1699 = vmatprep.mubr.f32.mxu0 0.0
        %1700 = vmatmul.mubr.f32.gmra.mrb[0].mxu0 %v1242
        %v1701 = vpop.f32.mrb[0].mxu0
        %v1702 = vadd.f32 %v1396, %v1701
        %v1703 = vpop.f32.mrb[0].mxu0
        %v1704 = vadd.f32 %v1398, %v1703
        %1705 = vmatprep.mubr.f32.mxu0 0.0
        %1706 = vmatmul.mubr.f32.gmra.mrb[0].mxu0 %v1243
        %v1707 = vpop.f32.mrb[0].mxu0
        %v1708 = vadd.f32 %v1402, %v1707
        %v1709 = vpop.f32.mrb[0].mxu0
        %v1710 = vadd.f32 %v1404, %v1709
        %1711 = vmatprep.mubr.f32.mxu0 0.0
        %1712 = vmatmul.mubr.f32.gmra.mrb[0].mxu0 %v1244
        %v1713 = vpop.f32.mrb[0].mxu0
        %v1714 = vadd.f32 %v1408, %v1713
        %v1715 = vpop.f32.mrb[0].mxu0
        %v1716 = vadd.f32 %v1410, %v1715
        %1717 = vmatprep.mubr.f32.mxu0 0.0
        %1718 = vmatmul.mubr.f32.gmra.mrb[0].mxu0 %v1245
        %v1719 = vpop.f32.mrb[0].mxu0
        %v1720 = vadd.f32 %v1414, %v1719
        %v1721 = vpop.f32.mrb[0].mxu0
        %v1722 = vadd.f32 %v1416, %v1721
        %1723 = vmatprep.mubr.f32.mxu0 0.0
        %1724 = vmatmul.mubr.f32.gmra.mrb[0].mxu0 %v1246
        %v1725 = vpop.f32.mrb[0].mxu0
        %v1726 = vadd.f32 %v1420, %v1725
        %v1727 = vpop.f32.mrb[0].mxu0
        %v1728 = vadd.f32 %v1422, %v1727
        %1729 = vdwg.mxu0
        %1730 = vmatprep.subr.mxu0 0.0
        %1731 = vmatpush1.msra.mxu0 %v1177
        %1732 = vmatprep.subr.mxu0 0.0
        %1733 = vmatpush1.msra.mxu0 %v1180
        %1734 = vmatprep.subr.mxu0 0.0
        %1735 = vmatpush1.msra.mxu0 %v1183
        %1736 = vmatprep.subr.mxu0 0.0
        %1737 = vmatpush1.msra.mxu0 %v1186
        %1738 = vmatprep.subr.mxu0 0.0
        %1739 = vmatpush1.msra.mxu0 %v1189
        %1740 = vmatprep.subr.mxu0 0.0
        %1741 = vmatpush1.msra.mxu0 %v1192
        %1742 = vmatprep.subr.mxu0 0.0
        %1743 = vmatpush1.msra.mxu0 %v1195
        %1744 = vmatprep.subr.mxu0 0.0
        %1745 = vmatpush1.msra.mxu0 %v1198
        %1746 = vmatprep.subr.mxu0 0.0
        %1747 = vmatpush1.msra.mxu0 %v1201
        %1748 = vmatprep.subr.mxu0 0.0
        %1749 = vmatpush1.msra.mxu0 %v1204
        %1750 = vmatprep.subr.mxu0 0.0
        %1751 = vmatpush1.msra.mxu0 %v1207
        %1752 = vmatprep.subr.mxu0 0.0
        %1753 = vmatpush1.msra.mxu0 %v1210
        %1754 = vmatprep.subr.mxu0 0.0
        %1755 = vmatpush1.msra.mxu0 %v1213
        %1756 = vmatprep.subr.mxu0 0.0
        %1757 = vmatpush1.msra.mxu0 %v1216
        %1758 = vmatprep.subr.mxu0 0.0
        %1759 = vmatpush1.msra.mxu0 %v1219
        %1760 = vmatprep.subr.mxu0 0.0
        %1761 = vmatpush1.msra.mxu0 %v1222
        %1762 = vmatprep.subr.mxu0 0.0
        %1763 = vmatpush1.msra.mxu0 0.0
        %1764 = vmatprep.subr.mxu0 0.0
        %1765 = vmatpush1.msra.mxu0 0.0
        %1766 = vmatprep.subr.mxu0 0.0
        %1767 = vmatpush1.msra.mxu0 0.0
        %1768 = vmatprep.subr.mxu0 0.0
        %1769 = vmatpush1.msra.mxu0 0.0
        %1770 = vmatprep.subr.mxu0 0.0
        %1771 = vmatpush1.msra.mxu0 0.0
        %1772 = vmatprep.subr.mxu0 0.0
        %1773 = vmatpush1.msra.mxu0 0.0
        %1774 = vmatprep.subr.mxu0 0.0
        %1775 = vmatpush1.msra.mxu0 0.0
        %1776 = vmatprep.subr.mxu0 0.0
        %1777 = vmatpush1.msra.mxu0 0.0
        %1778 = vmatprep.subr.mxu0 0.0
        %1779 = vmatpush1.msra.mxu0 0.0
        %1780 = vmatprep.subr.mxu0 0.0
        %1781 = vmatpush1.msra.mxu0 0.0
        %1782 = vmatprep.subr.mxu0 0.0
        %1783 = vmatpush1.msra.mxu0 0.0
        %1784 = vmatprep.subr.mxu0 0.0
        %1785 = vmatpush1.msra.mxu0 0.0
        %1786 = vmatprep.subr.mxu0 0.0
        %1787 = vmatpush1.msra.mxu0 0.0
        %1788 = vmatprep.subr.mxu0 0.0
        %1789 = vmatpush1.msra.mxu0 0.0
        %1790 = vmatprep.subr.mxu0 0.0
        %1791 = vmatpush1.msra.mxu0 0.0
        %1792 = vmatprep.subr.mxu0 0.0
        %1793 = vmatpush1.msra.mxu0 0.0
        %1794 = vmatprep.mubr.f32.mxu0 0.0
        %1795 = vmatmul.mubr.f32.gmra.mrb[0].mxu0 %v1231
        %v1796 = vpop.f32.mrb[0].mxu0
        %v1797 = vadd.f32 %v1491, %v1796
        %v1798 = vpop.f32.mrb[0].mxu0
        %1799 = vmatprep.mubr.f32.mxu0 0.0
        %1800 = vmatmul.mubr.f32.gmra.mrb[0].mxu0 %v1232
        %v1801 = vpop.f32.mrb[0].mxu0
        %v1802 = vadd.f32 %v1496, %v1801
        %v1803 = vpop.f32.mrb[0].mxu0
        %1804 = vmatprep.mubr.f32.mxu0 0.0
        %1805 = vmatmul.mubr.f32.gmra.mrb[0].mxu0 %v1233
        %v1806 = vpop.f32.mrb[0].mxu0
        %v1807 = vadd.f32 %v1501, %v1806
        %v1808 = vpop.f32.mrb[0].mxu0
        %1809 = vmatprep.mubr.f32.mxu0 0.0
        %1810 = vmatmul.mubr.f32.gmra.mrb[0].mxu0 %v1234
        %v1811 = vpop.f32.mrb[0].mxu0
        %v1812 = vadd.f32 %v1506, %v1811
        %v1813 = vpop.f32.mrb[0].mxu0
        %1814 = vmatprep.mubr.f32.mxu0 0.0
        %1815 = vmatmul.mubr.f32.gmra.mrb[0].mxu0 %v1235
        %v1816 = vpop.f32.mrb[0].mxu0
        %v1817 = vadd.f32 %v1511, %v1816
        %v1818 = vpop.f32.mrb[0].mxu0
        %1819 = vmatprep.mubr.f32.mxu0 0.0
        %1820 = vmatmul.mubr.f32.gmra.mrb[0].mxu0 %v1236
        %v1821 = vpop.f32.mrb[0].mxu0
        %v1822 = vadd.f32 %v1516, %v1821
        %v1823 = vpop.f32.mrb[0].mxu0
        %1824 = vmatprep.mubr.f32.mxu0 0.0
        %1825 = vmatmul.mubr.f32.gmra.mrb[0].mxu0 %v1237
        %v1826 = vpop.f32.mrb[0].mxu0
        %v1827 = vadd.f32 %v1521, %v1826
        %v1828 = vpop.f32.mrb[0].mxu0
        %1829 = vmatprep.mubr.f32.mxu0 0.0
        %1830 = vmatmul.mubr.f32.gmra.mrb[0].mxu0 %v1238
        %v1831 = vpop.f32.mrb[0].mxu0
        %v1832 = vadd.f32 %v1526, %v1831
        %v1833 = vpop.f32.mrb[0].mxu0
        %1834 = vmatprep.mubr.f32.mxu0 0.0
        %1835 = vmatmul.mubr.f32.gmra.mrb[0].mxu0 %v1239
        %v1836 = vpop.f32.mrb[0].mxu0
        %v1837 = vadd.f32 %v1531, %v1836
        %v1838 = vpop.f32.mrb[0].mxu0
        %1839 = vmatprep.mubr.f32.mxu0 0.0
        %1840 = vmatmul.mubr.f32.gmra.mrb[0].mxu0 %v1240
        %v1841 = vpop.f32.mrb[0].mxu0
        %v1842 = vadd.f32 %v1536, %v1841
        %v1843 = vpop.f32.mrb[0].mxu0
        %1844 = vmatprep.mubr.f32.mxu0 0.0
        %1845 = vmatmul.mubr.f32.gmra.mrb[0].mxu0 %v1241
        %v1846 = vpop.f32.mrb[0].mxu0
        %v1847 = vadd.f32 %v1541, %v1846
        %v1848 = vpop.f32.mrb[0].mxu0
        %1849 = vmatprep.mubr.f32.mxu0 0.0
        %1850 = vmatmul.mubr.f32.gmra.mrb[0].mxu0 %v1242
        %v1851 = vpop.f32.mrb[0].mxu0
        %v1852 = vadd.f32 %v1546, %v1851
        %v1853 = vpop.f32.mrb[0].mxu0
        %1854 = vmatprep.mubr.f32.mxu0 0.0
        %1855 = vmatmul.mubr.f32.gmra.mrb[0].mxu0 %v1243
        %v1856 = vpop.f32.mrb[0].mxu0
        %v1857 = vadd.f32 %v1551, %v1856
        %v1858 = vpop.f32.mrb[0].mxu0
        %1859 = vmatprep.mubr.f32.mxu0 0.0
        %1860 = vmatmul.mubr.f32.gmra.mrb[0].mxu0 %v1244
        %v1861 = vpop.f32.mrb[0].mxu0
        %v1862 = vadd.f32 %v1556, %v1861
        %v1863 = vpop.f32.mrb[0].mxu0
        %1864 = vmatprep.mubr.f32.mxu0 0.0
        %1865 = vmatmul.mubr.f32.gmra.mrb[0].mxu0 %v1245
        %v1866 = vpop.f32.mrb[0].mxu0
        %v1867 = vadd.f32 %v1561, %v1866
        %v1868 = vpop.f32.mrb[0].mxu0
        %1869 = vmatprep.mubr.f32.mxu0 0.0
        %1870 = vmatmul.mubr.f32.gmra.mrb[0].mxu0 %v1246
        %v1871 = vpop.f32.mrb[0].mxu0
        %v1872 = vadd.f32 %v1566, %v1871
        %v1873 = vpop.f32.mrb[0].mxu0
        %1874 = vdwg.mxu0
        %v1875 = vld [vmem:[%s367] sm:$0xff]
        %v1876 = vld [vmem:[%s367 + $0x8] sm:$0xff]
        %v1877 = vld [vmem:[%s367 + $0x10] sm:$0xff]
        %v1878 = vld [vmem:[%s367 + $0x18] sm:$0xff]
        %v1879 = vld [vmem:[%s367 + $0x20] sm:$0xff]
        %v1880 = vld [vmem:[%s367 + $0x28] sm:$0xff]
        %v1881 = vld [vmem:[%s367 + $0x30] sm:$0xff]
        %v1882 = vld [vmem:[%s367 + $0x38] sm:$0xff]
        %v1883 = vld [vmem:[%s367 + $0x40] sm:$0xff]
        %v1884 = vld [vmem:[%s367 + $0x48] sm:$0xff]
        %v1885 = vld [vmem:[%s367 + $0x50] sm:$0xff]
        %v1886 = vld [vmem:[%s367 + $0x58] sm:$0xff]
        %v1887 = vld [vmem:[%s367 + $0x60] sm:$0xff]
        %v1888 = vld [vmem:[%s367 + $0x68] sm:$0xff]
        %v1889 = vld [vmem:[%s367 + $0x70] sm:$0xff]
        %v1890 = vld [vmem:[%s367 + $0x78] sm:$0xff]
        %v1891 = vld [vmem:[%s367 + $0x80] sm:$0xff]
        %v1892 = vld [vmem:[%s367 + $0x88] sm:$0xff]
        %v1893 = vld [vmem:[%s367 + $0x90] sm:$0xff]
        %v1894 = vld [vmem:[%s367 + $0x98] sm:$0xff]
        %v1895 = vld [vmem:[%s367 + $0xa0] sm:$0xff]
        %v1896 = vld [vmem:[%s367 + $0xa8] sm:$0xff]
        %v1897 = vld [vmem:[%s367 + $0xb0] sm:$0xff]
        %v1898 = vld [vmem:[%s367 + $0xb8] sm:$0xff]
        %v1899 = vld [vmem:[%s367 + $0xc0] sm:$0xff]
        %v1900 = vld [vmem:[%s367 + $0xc8] sm:$0xff]
        %v1901 = vld [vmem:[%s367 + $0xd0] sm:$0xff]
        %v1902 = vld [vmem:[%s367 + $0xd8] sm:$0xff]
        %v1903 = vld [vmem:[%s367 + $0xe0] sm:$0xff]
        %v1904 = vld [vmem:[%s367 + $0xe8] sm:$0xff]
        %v1905 = vld [vmem:[%s367 + $0xf0] sm:$0xff]
        %v1906 = vld [vmem:[%s367 + $0xf8] sm:$0xff]
        %v1907 = vld [vmem:[%s367 + $0x100] sm:$0xff]
        %v1908 = vld [vmem:[%s367 + $0x108] sm:$0xff]
        %v1909 = vld [vmem:[%s367 + $0x110] sm:$0xff]
        %v1910 = vld [vmem:[%s367 + $0x118] sm:$0xff]
        %v1911 = vld [vmem:[%s367 + $0x120] sm:$0xff]
        %v1912 = vld [vmem:[%s367 + $0x128] sm:$0xff]
        %v1913 = vld [vmem:[%s367 + $0x130] sm:$0xff]
        %v1914 = vld [vmem:[%s367 + $0x138] sm:$0xff]
        %v1915 = vld [vmem:[%s367 + $0x140] sm:$0xff]
        %v1916 = vld [vmem:[%s367 + $0x148] sm:$0xff]
        %v1917 = vld [vmem:[%s367 + $0x150] sm:$0xff]
        %v1918 = vld [vmem:[%s367 + $0x158] sm:$0xff]
        %v1919 = vld [vmem:[%s367 + $0x160] sm:$0xff]
        %v1920 = vld [vmem:[%s367 + $0x168] sm:$0xff]
        %v1921 = vld [vmem:[%s367 + $0x170] sm:$0xff]
        %v1922 = vld [vmem:[%s367 + $0x178] sm:$0xff]
        %v1923 = vmul.f32 %v1636, %v1875
        %v1924 = vmul.f32 %v1638, %v1876
        %v1925 = vmul.f32 %v1797, %v1877
        %v1926 = vmul.f32 %v1642, %v1878
        %v1927 = vmul.f32 %v1644, %v1879
        %v1928 = vmul.f32 %v1802, %v1880
        %v1929 = vmul.f32 %v1648, %v1881
        %v1930 = vmul.f32 %v1650, %v1882
        %v1931 = vmul.f32 %v1807, %v1883
        %v1932 = vmul.f32 %v1654, %v1884
        %v1933 = vmul.f32 %v1656, %v1885
        %v1934 = vmul.f32 %v1812, %v1886
        %v1935 = vmul.f32 %v1660, %v1887
        %v1936 = vmul.f32 %v1662, %v1888
        %v1937 = vmul.f32 %v1817, %v1889
        %v1938 = vmul.f32 %v1666, %v1890
        %v1939 = vmul.f32 %v1668, %v1891
        %v1940 = vmul.f32 %v1822, %v1892
        %v1941 = vmul.f32 %v1672, %v1893
        %v1942 = vmul.f32 %v1674, %v1894
        %v1943 = vmul.f32 %v1827, %v1895
        %v1944 = vmul.f32 %v1678, %v1896
        %v1945 = vmul.f32 %v1680, %v1897
        %v1946 = vmul.f32 %v1832, %v1898
        %v1947 = vmul.f32 %v1684, %v1899
        %v1948 = vmul.f32 %v1686, %v1900
        %v1949 = vmul.f32 %v1837, %v1901
        %v1950 = vmul.f32 %v1690, %v1902
        %v1951 = vmul.f32 %v1692, %v1903
        %v1952 = vmul.f32 %v1842, %v1904
        %v1953 = vmul.f32 %v1696, %v1905
        %v1954 = vmul.f32 %v1698, %v1906
        %v1955 = vmul.f32 %v1847, %v1907
        %v1956 = vmul.f32 %v1702, %v1908
        %v1957 = vmul.f32 %v1704, %v1909
        %v1958 = vmul.f32 %v1852, %v1910
        %v1959 = vmul.f32 %v1708, %v1911
        %v1960 = vmul.f32 %v1710, %v1912
        %v1961 = vmul.f32 %v1857, %v1913
        %v1962 = vmul.f32 %v1714, %v1914
        %v1963 = vmul.f32 %v1716, %v1915
        %v1964 = vmul.f32 %v1862, %v1916
        %v1965 = vmul.f32 %v1720, %v1917
        %v1966 = vmul.f32 %v1722, %v1918
        %v1967 = vmul.f32 %v1867, %v1919
        %v1968 = vmul.f32 %v1726, %v1920
        %v1969 = vmul.f32 %v1728, %v1921
        %v1970 = vmul.f32 %v1872, %v1922
        %v1971 = vld [vmem:[#allocation6] sm:$0x77]
        %v1972 = vld [vmem:[#allocation6 + $0x8] sm:$0x7]
        %v1975 = vlaneseq
        %v1976 = vshrl.u32 %v1975, 7
        %v1977 = vsub.s32 0, %v1976
        %v1978 = vrot.slane %v1971, %v1977
        %v1979 = vlaneseq
        %v1980 = vshrl.u32 %v1979, 7
        %v1981 = vsub.s32 4, %v1980
        %v1982 = vrot.slane %v1971, %v1981
        %v1983 = vlaneseq
        %v1984 = vshrl.u32 %v1983, 7
        %v1985 = vsub.s32 0, %v1984
        %v1986 = vrot.slane %v1972, %v1985
        %v1990 = vlaneseq
        %v1991 = vshrl.u32 %v1990, 7
        %v1992 = vsub.s32 0, %v1991
        %v1993 = vrot.slane %v1978, %v1992
        %v1994 = vlaneseq
        %v1995 = vshrl.u32 %v1994, 7
        %v1996 = vsub.s32 0, %v1995
        %v1997 = vrot.slane %v1982, %v1996
        %v1998 = vlaneseq
        %v1999 = vshrl.u32 %v1998, 7
        %v2000 = vsub.s32 0, %v1999
        %v2001 = vrot.slane %v1986, %v2000
        %v2002 = vmul.f32 %v1923, %v1993
        %v2003 = vmul.f32 %v1924, %v1997
        %v2004 = vmul.f32 %v1925, %v2001
        %v2005 = vmul.f32 %v1926, %v1993
        %v2006 = vmul.f32 %v1927, %v1997
        %v2007 = vmul.f32 %v1928, %v2001
        %v2008 = vmul.f32 %v1929, %v1993
        %v2009 = vmul.f32 %v1930, %v1997
        %v2010 = vmul.f32 %v1931, %v2001
        %v2011 = vmul.f32 %v1932, %v1993
        %v2012 = vmul.f32 %v1933, %v1997
        %v2013 = vmul.f32 %v1934, %v2001
        %v2014 = vmul.f32 %v1935, %v1993
        %v2015 = vmul.f32 %v1936, %v1997
        %v2016 = vmul.f32 %v1937, %v2001
        %v2017 = vmul.f32 %v1938, %v1993
        %v2018 = vmul.f32 %v1939, %v1997
        %v2019 = vmul.f32 %v1940, %v2001
        %v2020 = vmul.f32 %v1941, %v1993
        %v2021 = vmul.f32 %v1942, %v1997
        %v2022 = vmul.f32 %v1943, %v2001
        %v2023 = vmul.f32 %v1944, %v1993
        %v2024 = vmul.f32 %v1945, %v1997
        %v2025 = vmul.f32 %v1946, %v2001
        %v2026 = vmul.f32 %v1947, %v1993
        %v2027 = vmul.f32 %v1948, %v1997
        %v2028 = vmul.f32 %v1949, %v2001
        %v2029 = vmul.f32 %v1950, %v1993
        %v2030 = vmul.f32 %v1951, %v1997
        %v2031 = vmul.f32 %v1952, %v2001
        %v2032 = vmul.f32 %v1953, %v1993
        %v2033 = vmul.f32 %v1954, %v1997
        %v2034 = vmul.f32 %v1955, %v2001
        %v2035 = vmul.f32 %v1956, %v1993
        %v2036 = vmul.f32 %v1957, %v1997
        %v2037 = vmul.f32 %v1958, %v2001
        %v2038 = vmul.f32 %v1959, %v1993
        %v2039 = vmul.f32 %v1960, %v1997
        %v2040 = vmul.f32 %v1961, %v2001
        %v2041 = vmul.f32 %v1962, %v1993
        %v2042 = vmul.f32 %v1963, %v1997
        %v2043 = vmul.f32 %v1964, %v2001
        %v2044 = vmul.f32 %v1965, %v1993
        %v2045 = vmul.f32 %v1966, %v1997
        %v2046 = vmul.f32 %v1967, %v2001
        %v2047 = vmul.f32 %v1968, %v1993
        %v2048 = vmul.f32 %v1969, %v1997
        %v2049 = vmul.f32 %v1970, %v2001
        %v2050 = vadd.f32 %v2002, %v2003
        %v2051 = vadd.f32 %v2050, %v2004
        %2052 = vadd.xlane.f32.xlu0 %v2051
        %v2053 = vpop.xlane.xlu0 %2052
        %v2054 = vadd.f32 %v2005, %v2006
        %v2055 = vadd.f32 %v2054, %v2007
        %2056 = vadd.xlane.f32.xlu0 %v2055
        %v2057 = vpop.xlane.xlu0 %2056
        %v2058 = vadd.f32 %v2008, %v2009
        %v2059 = vadd.f32 %v2058, %v2010
        %2060 = vadd.xlane.f32.xlu0 %v2059
        %v2061 = vpop.xlane.xlu0 %2060
        %v2062 = vadd.f32 %v2011, %v2012
        %v2063 = vadd.f32 %v2062, %v2013
        %2064 = vadd.xlane.f32.xlu0 %v2063
        %v2065 = vpop.xlane.xlu0 %2064
        %v2066 = vadd.f32 %v2014, %v2015
        %v2067 = vadd.f32 %v2066, %v2016
        %2068 = vadd.xlane.f32.xlu0 %v2067
        %v2069 = vpop.xlane.xlu0 %2068
        %v2070 = vadd.f32 %v2017, %v2018
        %v2071 = vadd.f32 %v2070, %v2019
        %2072 = vadd.xlane.f32.xlu0 %v2071
        %v2073 = vpop.xlane.xlu0 %2072
        %v2074 = vadd.f32 %v2020, %v2021
        %v2075 = vadd.f32 %v2074, %v2022
        %2076 = vadd.xlane.f32.xlu0 %v2075
        %v2077 = vpop.xlane.xlu0 %2076
        %v2078 = vadd.f32 %v2023, %v2024
        %v2079 = vadd.f32 %v2078, %v2025
        %2080 = vadd.xlane.f32.xlu0 %v2079
        %v2081 = vpop.xlane.xlu0 %2080
        %v2082 = vadd.f32 %v2026, %v2027
        %v2083 = vadd.f32 %v2082, %v2028
        %2084 = vadd.xlane.f32.xlu0 %v2083
        %v2085 = vpop.xlane.xlu0 %2084
        %v2086 = vadd.f32 %v2029, %v2030
        %v2087 = vadd.f32 %v2086, %v2031
        %2088 = vadd.xlane.f32.xlu0 %v2087
        %v2089 = vpop.xlane.xlu0 %2088
        %v2090 = vadd.f32 %v2032, %v2033
        %v2091 = vadd.f32 %v2090, %v2034
        %2092 = vadd.xlane.f32.xlu0 %v2091
        %v2093 = vpop.xlane.xlu0 %2092
        %v2094 = vadd.f32 %v2035, %v2036
        %v2095 = vadd.f32 %v2094, %v2037
        %2096 = vadd.xlane.f32.xlu0 %v2095
        %v2097 = vpop.xlane.xlu0 %2096
        %v2098 = vadd.f32 %v2038, %v2039
        %v2099 = vadd.f32 %v2098, %v2040
        %2100 = vadd.xlane.f32.xlu0 %v2099
        %v2101 = vpop.xlane.xlu0 %2100
        %v2102 = vadd.f32 %v2041, %v2042
        %v2103 = vadd.f32 %v2102, %v2043
        %2104 = vadd.xlane.f32.xlu0 %v2103
        %v2105 = vpop.xlane.xlu0 %2104
        %v2106 = vadd.f32 %v2044, %v2045
        %v2107 = vadd.f32 %v2106, %v2046
        %2108 = vadd.xlane.f32.xlu0 %v2107
        %v2109 = vpop.xlane.xlu0 %2108
        %v2110 = vadd.f32 %v2047, %v2048
        %v2111 = vadd.f32 %v2110, %v2049
        %2112 = vadd.xlane.f32.xlu0 %v2111
        %v2113 = vpop.xlane.xlu0 %2112
        %v2114 = vlaneseq
        %v2115 = vshrl.u32 %v2114, 7
        %v2116 = vsub.s32 1, %v2115
        %v2117 = vrot.slane %v1971, %v2116
        %v2118 = vlaneseq
        %v2119 = vshrl.u32 %v2118, 7
        %v2120 = vsub.s32 5, %v2119
        %v2121 = vrot.slane %v1971, %v2120
        %v2122 = vlaneseq
        %v2123 = vshrl.u32 %v2122, 7
        %v2124 = vsub.s32 1, %v2123
        %v2125 = vrot.slane %v1972, %v2124
        %v2129 = vlaneseq
        %v2130 = vshrl.u32 %v2129, 7
        %v2131 = vsub.s32 1, %v2130
        %v2132 = vrot.slane %v2117, %v2131
        %v2133 = vlaneseq
        %v2134 = vshrl.u32 %v2133, 7
        %v2135 = vsub.s32 1, %v2134
        %v2136 = vrot.slane %v2121, %v2135
        %v2137 = vlaneseq
        %v2138 = vshrl.u32 %v2137, 7
        %v2139 = vsub.s32 1, %v2138
        %v2140 = vrot.slane %v2125, %v2139
        %v2141 = vmul.f32 %v1923, %v2132
        %v2142 = vmul.f32 %v1924, %v2136
        %v2143 = vmul.f32 %v1925, %v2140
        %v2144 = vmul.f32 %v1926, %v2132
        %v2145 = vmul.f32 %v1927, %v2136
        %v2146 = vmul.f32 %v1928, %v2140
        %v2147 = vmul.f32 %v1929, %v2132
        %v2148 = vmul.f32 %v1930, %v2136
        %v2149 = vmul.f32 %v1931, %v2140
        %v2150 = vmul.f32 %v1932, %v2132
        %v2151 = vmul.f32 %v1933, %v2136
        %v2152 = vmul.f32 %v1934, %v2140
        %v2153 = vmul.f32 %v1935, %v2132
        %v2154 = vmul.f32 %v1936, %v2136
        %v2155 = vmul.f32 %v1937, %v2140
        %v2156 = vmul.f32 %v1938, %v2132
        %v2157 = vmul.f32 %v1939, %v2136
        %v2158 = vmul.f32 %v1940, %v2140
        %v2159 = vmul.f32 %v1941, %v2132
        %v2160 = vmul.f32 %v1942, %v2136
        %v2161 = vmul.f32 %v1943, %v2140
        %v2162 = vmul.f32 %v1944, %v2132
        %v2163 = vmul.f32 %v1945, %v2136
        %v2164 = vmul.f32 %v1946, %v2140
        %v2165 = vmul.f32 %v1947, %v2132
        %v2166 = vmul.f32 %v1948, %v2136
        %v2167 = vmul.f32 %v1949, %v2140
        %v2168 = vmul.f32 %v1950, %v2132
        %v2169 = vmul.f32 %v1951, %v2136
        %v2170 = vmul.f32 %v1952, %v2140
        %v2171 = vmul.f32 %v1953, %v2132
        %v2172 = vmul.f32 %v1954, %v2136
        %v2173 = vmul.f32 %v1955, %v2140
        %v2174 = vmul.f32 %v1956, %v2132
        %v2175 = vmul.f32 %v1957, %v2136
        %v2176 = vmul.f32 %v1958, %v2140
        %v2177 = vmul.f32 %v1959, %v2132
        %v2178 = vmul.f32 %v1960, %v2136
        %v2179 = vmul.f32 %v1961, %v2140
        %v2180 = vmul.f32 %v1962, %v2132
        %v2181 = vmul.f32 %v1963, %v2136
        %v2182 = vmul.f32 %v1964, %v2140
        %v2183 = vmul.f32 %v1965, %v2132
        %v2184 = vmul.f32 %v1966, %v2136
        %v2185 = vmul.f32 %v1967, %v2140
        %v2186 = vmul.f32 %v1968, %v2132
        %v2187 = vmul.f32 %v1969, %v2136
        %v2188 = vmul.f32 %v1970, %v2140
        %v2189 = vadd.f32 %v2141, %v2142
        %v2190 = vadd.f32 %v2189, %v2143
        %2191 = vadd.xlane.f32.xlu0 %v2190
        %v2192 = vpop.xlane.xlu0 %2191
        %v2193 = vadd.f32 %v2144, %v2145
        %v2194 = vadd.f32 %v2193, %v2146
        %2195 = vadd.xlane.f32.xlu0 %v2194
        %v2196 = vpop.xlane.xlu0 %2195
        %v2197 = vadd.f32 %v2147, %v2148
        %v2198 = vadd.f32 %v2197, %v2149
        %2199 = vadd.xlane.f32.xlu0 %v2198
        %v2200 = vpop.xlane.xlu0 %2199
        %v2201 = vadd.f32 %v2150, %v2151
        %v2202 = vadd.f32 %v2201, %v2152
        %2203 = vadd.xlane.f32.xlu0 %v2202
        %v2204 = vpop.xlane.xlu0 %2203
        %v2205 = vadd.f32 %v2153, %v2154
        %v2206 = vadd.f32 %v2205, %v2155
        %2207 = vadd.xlane.f32.xlu0 %v2206
        %v2208 = vpop.xlane.xlu0 %2207
        %v2209 = vadd.f32 %v2156, %v2157
        %v2210 = vadd.f32 %v2209, %v2158
        %2211 = vadd.xlane.f32.xlu0 %v2210
        %v2212 = vpop.xlane.xlu0 %2211
        %v2213 = vadd.f32 %v2159, %v2160
        %v2214 = vadd.f32 %v2213, %v2161
        %2215 = vadd.xlane.f32.xlu0 %v2214
        %v2216 = vpop.xlane.xlu0 %2215
        %v2217 = vadd.f32 %v2162, %v2163
        %v2218 = vadd.f32 %v2217, %v2164
        %2219 = vadd.xlane.f32.xlu0 %v2218
        %v2220 = vpop.xlane.xlu0 %2219
        %v2221 = vadd.f32 %v2165, %v2166
        %v2222 = vadd.f32 %v2221, %v2167
        %2223 = vadd.xlane.f32.xlu0 %v2222
        %v2224 = vpop.xlane.xlu0 %2223
        %v2225 = vadd.f32 %v2168, %v2169
        %v2226 = vadd.f32 %v2225, %v2170
        %2227 = vadd.xlane.f32.xlu0 %v2226
        %v2228 = vpop.xlane.xlu0 %2227
        %v2229 = vadd.f32 %v2171, %v2172
        %v2230 = vadd.f32 %v2229, %v2173
        %2231 = vadd.xlane.f32.xlu0 %v2230
        %v2232 = vpop.xlane.xlu0 %2231
        %v2233 = vadd.f32 %v2174, %v2175
        %v2234 = vadd.f32 %v2233, %v2176
        %2235 = vadd.xlane.f32.xlu0 %v2234
        %v2236 = vpop.xlane.xlu0 %2235
        %v2237 = vadd.f32 %v2177, %v2178
        %v2238 = vadd.f32 %v2237, %v2179
        %2239 = vadd.xlane.f32.xlu0 %v2238
        %v2240 = vpop.xlane.xlu0 %2239
        %v2241 = vadd.f32 %v2180, %v2181
        %v2242 = vadd.f32 %v2241, %v2182
        %2243 = vadd.xlane.f32.xlu0 %v2242
        %v2244 = vpop.xlane.xlu0 %2243
        %v2245 = vadd.f32 %v2183, %v2184
        %v2246 = vadd.f32 %v2245, %v2185
        %2247 = vadd.xlane.f32.xlu0 %v2246
        %v2248 = vpop.xlane.xlu0 %2247
        %v2249 = vadd.f32 %v2186, %v2187
        %v2250 = vadd.f32 %v2249, %v2188
        %2251 = vadd.xlane.f32.xlu0 %v2250
        %v2252 = vpop.xlane.xlu0 %2251
        %v2253 = vlaneseq
        %v2254 = vshrl.u32 %v2253, 7
        %v2255 = vsub.s32 2, %v2254
        %v2256 = vrot.slane %v1971, %v2255
        %v2257 = vlaneseq
        %v2258 = vshrl.u32 %v2257, 7
        %v2259 = vsub.s32 6, %v2258
        %v2260 = vrot.slane %v1971, %v2259
        %v2261 = vlaneseq
        %v2262 = vshrl.u32 %v2261, 7
        %v2263 = vsub.s32 2, %v2262
        %v2264 = vrot.slane %v1972, %v2263
        %v2268 = vlaneseq
        %v2269 = vshrl.u32 %v2268, 7
        %v2270 = vsub.s32 2, %v2269
        %v2271 = vrot.slane %v2256, %v2270
        %v2272 = vlaneseq
        %v2273 = vshrl.u32 %v2272, 7
        %v2274 = vsub.s32 2, %v2273
        %v2275 = vrot.slane %v2260, %v2274
        %v2276 = vlaneseq
        %v2277 = vshrl.u32 %v2276, 7
        %v2278 = vsub.s32 2, %v2277
        %v2279 = vrot.slane %v2264, %v2278
        %v2280 = vmul.f32 %v1923, %v2271
        %v2281 = vmul.f32 %v1924, %v2275
        %v2282 = vmul.f32 %v1925, %v2279
        %v2283 = vmul.f32 %v1926, %v2271
        %v2284 = vmul.f32 %v1927, %v2275
        %v2285 = vmul.f32 %v1928, %v2279
        %v2286 = vmul.f32 %v1929, %v2271
        %v2287 = vmul.f32 %v1930, %v2275
        %v2288 = vmul.f32 %v1931, %v2279
        %v2289 = vmul.f32 %v1932, %v2271
        %v2290 = vmul.f32 %v1933, %v2275
        %v2291 = vmul.f32 %v1934, %v2279
        %v2292 = vmul.f32 %v1935, %v2271
        %v2293 = vmul.f32 %v1936, %v2275
        %v2294 = vmul.f32 %v1937, %v2279
        %v2295 = vmul.f32 %v1938, %v2271
        %v2296 = vmul.f32 %v1939, %v2275
        %v2297 = vmul.f32 %v1940, %v2279
        %v2298 = vmul.f32 %v1941, %v2271
        %v2299 = vmul.f32 %v1942, %v2275
        %v2300 = vmul.f32 %v1943, %v2279
        %v2301 = vmul.f32 %v1944, %v2271
        %v2302 = vmul.f32 %v1945, %v2275
        %v2303 = vmul.f32 %v1946, %v2279
        %v2304 = vmul.f32 %v1947, %v2271
        %v2305 = vmul.f32 %v1948, %v2275
        %v2306 = vmul.f32 %v1949, %v2279
        %v2307 = vmul.f32 %v1950, %v2271
        %v2308 = vmul.f32 %v1951, %v2275
        %v2309 = vmul.f32 %v1952, %v2279
        %v2310 = vmul.f32 %v1953, %v2271
        %v2311 = vmul.f32 %v1954, %v2275
        %v2312 = vmul.f32 %v1955, %v2279
        %v2313 = vmul.f32 %v1956, %v2271
        %v2314 = vmul.f32 %v1957, %v2275
        %v2315 = vmul.f32 %v1958, %v2279
        %v2316 = vmul.f32 %v1959, %v2271
        %v2317 = vmul.f32 %v1960, %v2275
        %v2318 = vmul.f32 %v1961, %v2279
        %v2319 = vmul.f32 %v1962, %v2271
        %v2320 = vmul.f32 %v1963, %v2275
        %v2321 = vmul.f32 %v1964, %v2279
        %v2322 = vmul.f32 %v1965, %v2271
        %v2323 = vmul.f32 %v1966, %v2275
        %v2324 = vmul.f32 %v1967, %v2279
        %v2325 = vmul.f32 %v1968, %v2271
        %v2326 = vmul.f32 %v1969, %v2275
        %v2327 = vmul.f32 %v1970, %v2279
        %v2328 = vadd.f32 %v2280, %v2281
        %v2329 = vadd.f32 %v2328, %v2282
        %2330 = vadd.xlane.f32.xlu0 %v2329
        %v2331 = vpop.xlane.xlu0 %2330
        %v2332 = vadd.f32 %v2283, %v2284
        %v2333 = vadd.f32 %v2332, %v2285
        %2334 = vadd.xlane.f32.xlu0 %v2333
        %v2335 = vpop.xlane.xlu0 %2334
        %v2336 = vadd.f32 %v2286, %v2287
        %v2337 = vadd.f32 %v2336, %v2288
        %2338 = vadd.xlane.f32.xlu0 %v2337
        %v2339 = vpop.xlane.xlu0 %2338
        %v2340 = vadd.f32 %v2289, %v2290
        %v2341 = vadd.f32 %v2340, %v2291
        %2342 = vadd.xlane.f32.xlu0 %v2341
        %v2343 = vpop.xlane.xlu0 %2342
        %v2344 = vadd.f32 %v2292, %v2293
        %v2345 = vadd.f32 %v2344, %v2294
        %2346 = vadd.xlane.f32.xlu0 %v2345
        %v2347 = vpop.xlane.xlu0 %2346
        %v2348 = vadd.f32 %v2295, %v2296
        %v2349 = vadd.f32 %v2348, %v2297
        %2350 = vadd.xlane.f32.xlu0 %v2349
        %v2351 = vpop.xlane.xlu0 %2350
        %v2352 = vadd.f32 %v2298, %v2299
        %v2353 = vadd.f32 %v2352, %v2300
        %2354 = vadd.xlane.f32.xlu0 %v2353
        %v2355 = vpop.xlane.xlu0 %2354
        %v2356 = vadd.f32 %v2301, %v2302
        %v2357 = vadd.f32 %v2356, %v2303
        %2358 = vadd.xlane.f32.xlu0 %v2357
        %v2359 = vpop.xlane.xlu0 %2358
        %v2360 = vadd.f32 %v2304, %v2305
        %v2361 = vadd.f32 %v2360, %v2306
        %2362 = vadd.xlane.f32.xlu0 %v2361
        %v2363 = vpop.xlane.xlu0 %2362
        %v2364 = vadd.f32 %v2307, %v2308
        %v2365 = vadd.f32 %v2364, %v2309
        %2366 = vadd.xlane.f32.xlu0 %v2365
        %v2367 = vpop.xlane.xlu0 %2366
        %v2368 = vadd.f32 %v2310, %v2311
        %v2369 = vadd.f32 %v2368, %v2312
        %2370 = vadd.xlane.f32.xlu0 %v2369
        %v2371 = vpop.xlane.xlu0 %2370
        %v2372 = vadd.f32 %v2313, %v2314
        %v2373 = vadd.f32 %v2372, %v2315
        %2374 = vadd.xlane.f32.xlu0 %v2373
        %v2375 = vpop.xlane.xlu0 %2374
        %v2376 = vadd.f32 %v2316, %v2317
        %v2377 = vadd.f32 %v2376, %v2318
        %2378 = vadd.xlane.f32.xlu0 %v2377
        %v2379 = vpop.xlane.xlu0 %2378
        %v2380 = vadd.f32 %v2319, %v2320
        %v2381 = vadd.f32 %v2380, %v2321
        %2382 = vadd.xlane.f32.xlu0 %v2381
        %v2383 = vpop.xlane.xlu0 %2382
        %v2384 = vadd.f32 %v2322, %v2323
        %v2385 = vadd.f32 %v2384, %v2324
        %2386 = vadd.xlane.f32.xlu0 %v2385
        %v2387 = vpop.xlane.xlu0 %2386
        %v2388 = vadd.f32 %v2325, %v2326
        %v2389 = vadd.f32 %v2388, %v2327
        %2390 = vadd.xlane.f32.xlu0 %v2389
        %v2391 = vpop.xlane.xlu0 %2390
        %vm2392 = vcmask 7168
        %v2393 = vsel %vm2392, %v2053, %v2192
        %v2394 = vsel %vm2392, %v2057, %v2196
        %v2395 = vsel %vm2392, %v2061, %v2200
        %v2396 = vsel %vm2392, %v2065, %v2204
        %v2397 = vsel %vm2392, %v2069, %v2208
        %v2398 = vsel %vm2392, %v2073, %v2212
        %v2399 = vsel %vm2392, %v2077, %v2216
        %v2400 = vsel %vm2392, %v2081, %v2220
        %v2401 = vsel %vm2392, %v2085, %v2224
        %v2402 = vsel %vm2392, %v2089, %v2228
        %v2403 = vsel %vm2392, %v2093, %v2232
        %v2404 = vsel %vm2392, %v2097, %v2236
        %v2405 = vsel %vm2392, %v2101, %v2240
        %v2406 = vsel %vm2392, %v2105, %v2244
        %v2407 = vsel %vm2392, %v2109, %v2248
        %v2408 = vsel %vm2392, %v2113, %v2252
        %vm2409 = vcmask 15360
        %v2410 = vsel %vm2409, %v2393, %v2331
        %v2411 = vsel %vm2409, %v2394, %v2335
        %v2412 = vsel %vm2409, %v2395, %v2339
        %v2413 = vsel %vm2409, %v2396, %v2343
        %v2414 = vsel %vm2409, %v2397, %v2347
        %v2415 = vsel %vm2409, %v2398, %v2351
        %v2416 = vsel %vm2409, %v2399, %v2355
        %v2417 = vsel %vm2409, %v2400, %v2359
        %v2418 = vsel %vm2409, %v2401, %v2363
        %v2419 = vsel %vm2409, %v2402, %v2367
        %v2420 = vsel %vm2409, %v2403, %v2371
        %v2421 = vsel %vm2409, %v2404, %v2375
        %v2422 = vsel %vm2409, %v2405, %v2379
        %v2423 = vsel %vm2409, %v2406, %v2383
        %v2424 = vsel %vm2409, %v2407, %v2387
        %v2425 = vsel %vm2409, %v2408, %v2391
        %vm2426 = vcmask 23552
        %2427 = vst.msk [vmem:[%s404] sm:$0xff] %vm2426, %v2410
        %2428 = vst.msk [vmem:[%s404 + $0x8] sm:$0xff] %vm2426, %v2411
        %2429 = vst.msk [vmem:[%s404 + $0x10] sm:$0xff] %vm2426, %v2412
        %2430 = vst.msk [vmem:[%s404 + $0x18] sm:$0xff] %vm2426, %v2413
        %2431 = vst.msk [vmem:[%s404 + $0x20] sm:$0xff] %vm2426, %v2414
        %2432 = vst.msk [vmem:[%s404 + $0x28] sm:$0xff] %vm2426, %v2415
        %2433 = vst.msk [vmem:[%s404 + $0x30] sm:$0xff] %vm2426, %v2416
        %2434 = vst.msk [vmem:[%s404 + $0x38] sm:$0xff] %vm2426, %v2417
        %2435 = vst.msk [vmem:[%s404 + $0x40] sm:$0xff] %vm2426, %v2418
        %2436 = vst.msk [vmem:[%s404 + $0x48] sm:$0xff] %vm2426, %v2419
        %2437 = vst.msk [vmem:[%s404 + $0x50] sm:$0xff] %vm2426, %v2420
        %2438 = vst.msk [vmem:[%s404 + $0x58] sm:$0xff] %vm2426, %v2421
        %2439 = vst.msk [vmem:[%s404 + $0x60] sm:$0xff] %vm2426, %v2422
        %2440 = vst.msk [vmem:[%s404 + $0x68] sm:$0xff] %vm2426, %v2423
        %2441 = vst.msk [vmem:[%s404 + $0x70] sm:$0xff] %vm2426, %v2424
        %2442 = vst.msk [vmem:[%s404 + $0x78] sm:$0xff] %vm2426, %v2425
        %s2443 = sand.u32 %s174, 1
        %s2444 = sand.u32 %s174, 1
        %s2445 = smul.addr %s2444, 128
        %s2446 = scalar_lea.vmem [#allocation12], %s2445
        // Predicated region
        $region69: #{tpu_custom_call.1} parent=43 // pred_check
          %p2447 = pneg %p184
        $region70: #{tpu_custom_call.1} parent=43 // pred_check_branch
          %2449 = sbr.rel (%p2447) target = $region72
        $region71: #{tpu_custom_call.1} parent=43 // pred_region
          %s2450 = smul.u32 16, %s25
          %s2451 = ssub.s32 25, %s2450
          %p2452 = scmp.lt.s32.totalorder %s2451, 16
          %s2453 = scalar_select %p2452, %s2451, 16
          %s2454 = smul.u32 128, %s2453
          %p2455 = scmp.ne.s32.totalorder 0, %s2454
          %s2456 = smul.addr %s2450, 8
          %s2457 = scalar_lea.vmem %s6, %s2456
          // Predicated region
          $region73: #{tpu_custom_call.1} parent=71 // pred_check
            %p2458 = pneg %p2455
          $region74: #{tpu_custom_call.1} parent=71 // pred_check_branch
            %2460 = sbr.rel (%p2458) target = $region76
          $region75: #{tpu_custom_call.1} parent=71 // pred_region
            // Predicated region
            $region77: #{tpu_custom_call.1} parent=75 // pred_check
              _
            $region78: #{tpu_custom_call.1} parent=75 // pred_check_branch
              %2462 = sbr.rel (0) target = $region80
            $region79: #{tpu_custom_call.1} parent=75 // pred_region
              // Predicated region
              $region99: #{tpu_custom_call.1} parent=79 // pred_check
                _
              $region100: #{tpu_custom_call.1} parent=79 // pred_check_branch
                %2541 = sbr.rel (0) target = $region102
              $region101: #{tpu_custom_call.1} parent=79 // pred_region
                %s2542 = sshrl.u32 %s2453, 4
                // While loop
                $region103: #{tpu_custom_call.1} parent=101 // loop_pre_header
                  _
                $region104: #{tpu_custom_call.1} parent=101 // loop_header
                  %s2544 = sphi 0, %s2546
                  %p2545 = scmp.ge.s32.totalorder %s2544, %s2542
                  %s2549 = sphi 0, %s2586
                  %s2550 = sphi %s2446, %s2589
                  %s2551 = sphi %s2457, %s2590
                $region105: #{tpu_custom_call.1} parent=101 // loop_header_branch
                  %2548 = sbr.rel (%p2545) target = $region109
                $region106: #{tpu_custom_call.1} parent=101 // loop_body
                  %v2552 = vld [vmem:[%s2550] sm:$0xff]
                  %2553 = vst [vmem:[%s2551] sm:$0xff] %v2552
                  %v2554 = vld [vmem:[%s2550 + $0x8] sm:$0xff]
                  %2555 = vst [vmem:[%s2551 + $0x8] sm:$0xff] %v2554
                  %v2556 = vld [vmem:[%s2550 + $0x10] sm:$0xff]
                  %2557 = vst [vmem:[%s2551 + $0x10] sm:$0xff] %v2556
                  %v2558 = vld [vmem:[%s2550 + $0x18] sm:$0xff]
                  %2559 = vst [vmem:[%s2551 + $0x18] sm:$0xff] %v2558
                  %v2560 = vld [vmem:[%s2550 + $0x20] sm:$0xff]
                  %2561 = vst [vmem:[%s2551 + $0x20] sm:$0xff] %v2560
                  %v2562 = vld [vmem:[%s2550 + $0x28] sm:$0xff]
                  %2563 = vst [vmem:[%s2551 + $0x28] sm:$0xff] %v2562
                  %v2564 = vld [vmem:[%s2550 + $0x30] sm:$0xff]
                  %2565 = vst [vmem:[%s2551 + $0x30] sm:$0xff] %v2564
                  %v2566 = vld [vmem:[%s2550 + $0x38] sm:$0xff]
                  %2567 = vst [vmem:[%s2551 + $0x38] sm:$0xff] %v2566
                  %v2568 = vld [vmem:[%s2550 + $0x40] sm:$0xff]
                  %2569 = vst [vmem:[%s2551 + $0x40] sm:$0xff] %v2568
                  %v2570 = vld [vmem:[%s2550 + $0x48] sm:$0xff]
                  %2571 = vst [vmem:[%s2551 + $0x48] sm:$0xff] %v2570
                  %v2572 = vld [vmem:[%s2550 + $0x50] sm:$0xff]
                  %2573 = vst [vmem:[%s2551 + $0x50] sm:$0xff] %v2572
                  %v2574 = vld [vmem:[%s2550 + $0x58] sm:$0xff]
                  %2575 = vst [vmem:[%s2551 + $0x58] sm:$0xff] %v2574
                  %v2576 = vld [vmem:[%s2550 + $0x60] sm:$0xff]
                  %2577 = vst [vmem:[%s2551 + $0x60] sm:$0xff] %v2576
                  %v2578 = vld [vmem:[%s2550 + $0x68] sm:$0xff]
                  %2579 = vst [vmem:[%s2551 + $0x68] sm:$0xff] %v2578
                  %v2580 = vld [vmem:[%s2550 + $0x70] sm:$0xff]
                  %2581 = vst [vmem:[%s2551 + $0x70] sm:$0xff] %v2580
                  %v2582 = vld [vmem:[%s2550 + $0x78] sm:$0xff]
                  %2583 = vst [vmem:[%s2551 + $0x78] sm:$0xff] %v2582
                  %s2584 = sadd.s32 1, %s2549
                  %p2585 = scmp.ge.s32.totalorder %s2584, %s2542
                  %s2586 = scalar_select %p2585, 0, %s2584
                  %s2587 = smul.u32 %s2586, 128
                  %s2588 = smul.u32 %s2586, 128
                  %s2589 = scalar_lea.vmem %s2446, %s2587 [#allocation12]
                  %s2590 = scalar_lea.vmem %s2457, %s2588
                $region107: #{tpu_custom_call.1} parent=101 // loop_footer
                  %s2546 = sadd.s32 %s2544, 1
                $region108: #{tpu_custom_call.1} parent=101 // loop_footer_branch
                  %2543 = sbr.rel target = $region104
                $region109: #{tpu_custom_call.1} parent=101 // loop_exit
                  _
                %s2591 = sshrl.u32 %s2453, 4
                %s2592 = sand.u32 %s2453, 15
                %s2593 = smul.u32 %s2591, 16
                %s2594 = smul.u32 8, %s2593
                %s2595 = scalar_lea.vmem %s2446, %s2594 [#allocation12]
                %s2596 = smul.u32 8, %s2593
                %s2597 = scalar_lea.vmem %s2457, %s2596
                // While loop
                $region110: #{tpu_custom_call.1} parent=101 // loop_pre_header
                  _
                $region111: #{tpu_custom_call.1} parent=101 // loop_header
                  %s2599 = sphi 0, %s2601
                  %p2600 = scmp.ge.s32.totalorder %s2599, %s2592
                  %s2604 = sphi 0, %s2611
                  %s2605 = sphi %s2595, %s2614
                  %s2606 = sphi %s2597, %s2615
                $region112: #{tpu_custom_call.1} parent=101 // loop_header_branch
                  %2603 = sbr.rel (%p2600) target = $region116
                $region113: #{tpu_custom_call.1} parent=101 // loop_body
                  %v2607 = vld [vmem:[%s2605] sm:$0xff]
                  %2608 = vst [vmem:[%s2606] sm:$0xff] %v2607
                  %s2609 = sadd.s32 1, %s2604
                  %p2610 = scmp.ge.s32.totalorder %s2609, %s2592
                  %s2611 = scalar_select %p2610, 0, %s2609
                  %s2612 = smul.u32 %s2611, 8
                  %s2613 = smul.u32 %s2611, 8
                  %s2614 = scalar_lea.vmem %s2595, %s2612 [#allocation12]
                  %s2615 = scalar_lea.vmem %s2597, %s2613
                $region114: #{tpu_custom_call.1} parent=101 // loop_footer
                  %s2601 = sadd.s32 %s2599, 1
                $region115: #{tpu_custom_call.1} parent=101 // loop_footer_branch
                  %2598 = sbr.rel target = $region111
                $region116: #{tpu_custom_call.1} parent=101 // loop_exit
                  _
              $region102: #{tpu_custom_call.1} parent=79 // pred_fallthru
                _
              // Predicated region
              $region117: #{tpu_custom_call.1} parent=79 // pred_check
                _
              $region118: #{tpu_custom_call.1} parent=79 // pred_check_branch
                %2617 = sbr.rel target = $region120
              $region119: #{tpu_custom_call.1} parent=79 // pred_region
                _
              $region120: #{tpu_custom_call.1} parent=79 // pred_fallthru
                _
            $region80: #{tpu_custom_call.1} parent=75 // pred_fallthru
              _
            // Predicated region
            $region81: #{tpu_custom_call.1} parent=75 // pred_check
              _
            $region82: #{tpu_custom_call.1} parent=75 // pred_check_branch
              %2464 = sbr.rel target = $region84
            $region83: #{tpu_custom_call.1} parent=75 // pred_region
              %s2466 = sshrl.u32 %s2453, 4
              // While loop
              $region85: #{tpu_custom_call.1} parent=83 // loop_pre_header
                _
              $region86: #{tpu_custom_call.1} parent=83 // loop_header
                %s2468 = sphi 0, %s2470
                %p2469 = scmp.ge.s32.totalorder %s2468, %s2466
                %s2473 = sphi 0, %s2510
                %s2474 = sphi %s2446, %s2513
                %s2475 = sphi %s2457, %s2514
              $region87: #{tpu_custom_call.1} parent=83 // loop_header_branch
                %2472 = sbr.rel (%p2469) target = $region91
              $region88: #{tpu_custom_call.1} parent=83 // loop_body
                %v2476 = vld [vmem:[%s2474] sm:$0xff]
                %2477 = vst [vmem:[%s2475] sm:$0xff] %v2476
                %v2478 = vld [vmem:[%s2474 + $0x8] sm:$0xff]
                %2479 = vst [vmem:[%s2475 + $0x8] sm:$0xff] %v2478
                %v2480 = vld [vmem:[%s2474 + $0x10] sm:$0xff]
                %2481 = vst [vmem:[%s2475 + $0x10] sm:$0xff] %v2480
                %v2482 = vld [vmem:[%s2474 + $0x18] sm:$0xff]
                %2483 = vst [vmem:[%s2475 + $0x18] sm:$0xff] %v2482
                %v2484 = vld [vmem:[%s2474 + $0x20] sm:$0xff]
                %2485 = vst [vmem:[%s2475 + $0x20] sm:$0xff] %v2484
                %v2486 = vld [vmem:[%s2474 + $0x28] sm:$0xff]
                %2487 = vst [vmem:[%s2475 + $0x28] sm:$0xff] %v2486
                %v2488 = vld [vmem:[%s2474 + $0x30] sm:$0xff]
                %2489 = vst [vmem:[%s2475 + $0x30] sm:$0xff] %v2488
                %v2490 = vld [vmem:[%s2474 + $0x38] sm:$0xff]
                %2491 = vst [vmem:[%s2475 + $0x38] sm:$0xff] %v2490
                %v2492 = vld [vmem:[%s2474 + $0x40] sm:$0xff]
                %2493 = vst [vmem:[%s2475 + $0x40] sm:$0xff] %v2492
                %v2494 = vld [vmem:[%s2474 + $0x48] sm:$0xff]
                %2495 = vst [vmem:[%s2475 + $0x48] sm:$0xff] %v2494
                %v2496 = vld [vmem:[%s2474 + $0x50] sm:$0xff]
                %2497 = vst [vmem:[%s2475 + $0x50] sm:$0xff] %v2496
                %v2498 = vld [vmem:[%s2474 + $0x58] sm:$0xff]
                %2499 = vst [vmem:[%s2475 + $0x58] sm:$0xff] %v2498
                %v2500 = vld [vmem:[%s2474 + $0x60] sm:$0xff]
                %2501 = vst [vmem:[%s2475 + $0x60] sm:$0xff] %v2500
                %v2502 = vld [vmem:[%s2474 + $0x68] sm:$0xff]
                %2503 = vst [vmem:[%s2475 + $0x68] sm:$0xff] %v2502
                %v2504 = vld [vmem:[%s2474 + $0x70] sm:$0xff]
                %2505 = vst [vmem:[%s2475 + $0x70] sm:$0xff] %v2504
                %v2506 = vld [vmem:[%s2474 + $0x78] sm:$0xff]
                %2507 = vst [vmem:[%s2475 + $0x78] sm:$0xff] %v2506
                %s2508 = sadd.s32 1, %s2473
                %p2509 = scmp.ge.s32.totalorder %s2508, %s2466
                %s2510 = scalar_select %p2509, 0, %s2508
                %s2511 = smul.u32 %s2510, 128
                %s2512 = smul.u32 %s2510, 128
                %s2513 = scalar_lea.vmem %s2446, %s2511 [#allocation12]
                %s2514 = scalar_lea.vmem %s2457, %s2512
              $region89: #{tpu_custom_call.1} parent=83 // loop_footer
                %s2470 = sadd.s32 %s2468, 1
              $region90: #{tpu_custom_call.1} parent=83 // loop_footer_branch
                %2467 = sbr.rel target = $region86
              $region91: #{tpu_custom_call.1} parent=83 // loop_exit
                _
              %s2515 = sshrl.u32 %s2453, 4
              %s2516 = sand.u32 %s2453, 15
              %s2517 = smul.u32 %s2515, 16
              %s2518 = smul.u32 8, %s2517
              %s2519 = scalar_lea.vmem %s2446, %s2518 [#allocation12]
              %s2520 = smul.u32 8, %s2517
              %s2521 = scalar_lea.vmem %s2457, %s2520
              // While loop
              $region92: #{tpu_custom_call.1} parent=83 // loop_pre_header
                _
              $region93: #{tpu_custom_call.1} parent=83 // loop_header
                %s2523 = sphi 0, %s2525
                %p2524 = scmp.ge.s32.totalorder %s2523, %s2516
                %s2528 = sphi 0, %s2535
                %s2529 = sphi %s2519, %s2538
                %s2530 = sphi %s2521, %s2539
              $region94: #{tpu_custom_call.1} parent=83 // loop_header_branch
                %2527 = sbr.rel (%p2524) target = $region98
              $region95: #{tpu_custom_call.1} parent=83 // loop_body
                %v2531 = vld [vmem:[%s2529] sm:$0xff]
                %2532 = vst [vmem:[%s2530] sm:$0xff] %v2531
                %s2533 = sadd.s32 1, %s2528
                %p2534 = scmp.ge.s32.totalorder %s2533, %s2516
                %s2535 = scalar_select %p2534, 0, %s2533
                %s2536 = smul.u32 %s2535, 8
                %s2537 = smul.u32 %s2535, 8
                %s2538 = scalar_lea.vmem %s2519, %s2536 [#allocation12]
                %s2539 = scalar_lea.vmem %s2521, %s2537
              $region96: #{tpu_custom_call.1} parent=83 // loop_footer
                %s2525 = sadd.s32 %s2523, 1
              $region97: #{tpu_custom_call.1} parent=83 // loop_footer_branch
                %2522 = sbr.rel target = $region93
              $region98: #{tpu_custom_call.1} parent=83 // loop_exit
                _
            $region84: #{tpu_custom_call.1} parent=75 // pred_fallthru
              _
          $region76: #{tpu_custom_call.1} parent=71 // pred_fallthru
            _
          %2618 = vnop
        $region72: #{tpu_custom_call.1} parent=43 // pred_fallthru
          _
      $region44: #{tpu_custom_call.1} parent=5 // pred_fallthru
        _
      %p2619 = scmp.le.s32.totalorder 2, %s20
      // Predicated region
      $region121: #{tpu_custom_call.1} parent=5 // pred_check
        %p2620 = pneg %p2619
      $region122: #{tpu_custom_call.1} parent=5 // pred_check_branch
        %2622 = sbr.rel (%p2620) target = $region124
      $region123: #{tpu_custom_call.1} parent=5 // pred_region
        %s2623 = ssub.s32 %s20, 2
        // Predicated region
        $region125: #{tpu_custom_call.1} parent=123 // pred_check
          %p2624 = pneg %p190
        $region126: #{tpu_custom_call.1} parent=123 // pred_check_branch
          %2626 = sbr.rel (%p2624) target = $region128
        $region127: #{tpu_custom_call.1} parent=123 // pred_region
          %s2627 = sand.u32 %s175, 1
          %s2628 = sand.u32 %s175, 1
          %s2629 = smul.addr %s2628, 128
          %s2630 = scalar_lea.vmem [#allocation12], %s2629
        $region128: #{tpu_custom_call.1} parent=123 // pred_fallthru
          _
      $region124: #{tpu_custom_call.1} parent=5 // pred_fallthru
        _
    $region6: #{tpu_custom_call.1} parent=1 // loop_footer
      %s24 = sadd.s32 1, %s20
    $region7: #{tpu_custom_call.1} parent=1 // loop_footer_branch
      %19 = sbr.rel target = $region3
    $region8: #{tpu_custom_call.1} parent=1 // loop_exit
      _
    %2631 = vsyncpa [#allocation3], 1
    %s2632 = scalar_lea.sflag [#allocation3], 1
    %2633 = vsyncpa %s2632, 1
    %2634 = vsyncpa [#allocation5], 1
    %2635 = vsyncpa [#allocation8], 1
    %s2636 = scalar_lea.sflag [#allocation8], 1
    %2637 = vsyncpa %s2636, 1
    %2638 = vsyncpa [#allocation11], 1
    %s2639 = scalar_lea.sflag [#allocation11], 1
    %2640 = vsyncpa %s2639, 1

</llo_original>
